<compile_context>
chip_gen: v6e
topology: v6e:2x2x1
jax: 0.10.0
libtpu: 0.0.40
codegen_flags: <defaults>
</compile_context>

<pallas_src>
import jax
import jax.numpy as jnp
from jax.experimental import pallas as pl
from jax.experimental.pallas import tpu as pltpu

# ---------------- configuration ----------------
N = 2          # batch
CIN = 8        # in_channels
COUT = 8       # out_channels (== CIN, stride==1 -> residual branch active)
H = 16
W = 16
HW = H * W
NHW = N * HW   # 512 lanes (= 4 x 128, dense)
K = 3          # kernel_size (depthwise)
EXP = 4        # exp_factor
CMID = CIN * EXP
PAD = K // 2   # tf_mode=False -> padding = kernel_size // 2
BN_EPS = 1e-5

# Flat-spatial offsets of the 9 depthwise taps (dy*W + dx).
TAP_OFFSETS = tuple((ky - PAD) * W + (kx - PAD) for ky in range(K) for kx in range(K))
CENTER_TAP = K * K // 2


# ---------------- Pallas kernel ----------------
def effi_inv_res_kernel(xa_ref, w1a_ref, tapw_ref, mask_ref, b2_ref,
                        w3f_ref, w3r_ref, out_ref):
    """Whole batch in one step.  Layout: channels on sublanes, N*H*W on lanes."""
    # ---- conv1: 1x1 conv (BN scale + bias folded into the contraction) + ReLU
    # xa = [x; ones], w1a = [w1f | b1]  -> w1a @ xa = w1f @ x + b1
    h1 = jnp.maximum(
        jnp.dot(w1a_ref[...], xa_ref[...], preferred_element_type=jnp.float32),
        0.0)                                            # (CMID, NHW)

    # ---- conv2: 3x3 depthwise (pad=1, stride=1) + bias + ReLU ----
    # Taps via lane rolls (XLU).  Per-tap per-channel weight (CMID,1) and a
    # channel-independent zero-padding edge mask (1,NHW) applied in-kernel;
    # the mask also kills any roll wrap-around / cross-image leakage.
    acc = h1 * tapw_ref[CENTER_TAP] + b2_ref[...]       # center tap: mask == 1
    for t, off in enumerate(TAP_OFFSETS):
        if off == 0:
            continue
        shifted = pltpu.roll(h1, shift=(-off) % NHW, axis=1)
        acc = acc + shifted * tapw_ref[t] * mask_ref[t]
    h2 = jnp.maximum(acc, 0.0)                          # (CMID, NHW)

    # ---- conv3: 1x1 conv (BN folded, no activation) + bias + residual ----
    # w3r = [I_COUT | b3]  ->  w3r @ xa = x + b3   (residual + bias on the MXU)
    out_ref[...] = (
        jnp.dot(w3f_ref[...], h2, preferred_element_type=jnp.float32)
        + jnp.dot(w3r_ref[...], xa_ref[...], preferred_element_type=jnp.float32))


def effi_inv_res_unit(x_nchw, kp):
    """Wrapper: NCHW in / NCHW out (PyTorch convention)."""
    assert CIN == COUT, "residual branch requires in_channels == out_channels"
    # Lane-dense layout: channels on sublanes, concatenated batch*spatial on lanes.
    x = jnp.transpose(x_nchw, (1, 0, 2, 3)).reshape(CIN, NHW).astype(jnp.float32)
    xa = jnp.concatenate([x, jnp.ones((1, NHW), jnp.float32)], axis=0)  # (CIN+1, NHW)

    def full(shape):
        return pl.BlockSpec(shape, lambda i, _s=shape: (0,) * len(_s))

    out = pl.pallas_call(
        effi_inv_res_kernel,
        out_shape=jax.ShapeDtypeStruct((COUT, NHW), jnp.float32),
        grid=(1,),
        in_specs=[
            full((CIN + 1, NHW)),        # xa = [x; ones]
            full((CMID, CIN + 1)),       # w1a = [BN-folded w1 | b1]
            full((K * K, CMID, 1)),      # depthwise per-tap per-channel weights
            full((K * K, 1, NHW)),       # per-tap zero-padding edge mask
            full((CMID, 1)),             # b2
            full((COUT, CMID)),          # w3f (BN-folded, transposed)
            full((COUT, CIN + 1)),       # w3r = [I | b3]
        ],
        out_specs=full((COUT, NHW)),
        compiler_params=pltpu.CompilerParams(dimension_semantics=("arbitrary",)),
    )(xa, kp["w1a"], kp["tapw"], kp["mask"], kp["b2"], kp["w3f"], kp["w3r"])

    # (COUT, N*HW) -> (N, COUT, H, W)
    return jnp.transpose(out.reshape(COUT, N, H, W), (1, 0, 2, 3))


# ---------------- deterministic parameter init ----------------
def fold_bn(gamma, beta, mean, var, eps=BN_EPS):
    scale = gamma / jnp.sqrt(var + eps)
    bias = beta - mean * scale
    return scale, bias


def make_params(key):
    ks = jax.random.split(key, 6)
    w1 = 0.1 * jax.random.normal(ks[0], (CIN, CMID), jnp.float32)   # 1x1: (Cin, Cmid)
    w2 = 0.1 * jax.random.normal(ks[1], (K, K, CMID), jnp.float32)  # dw : (K, K, Cmid)
    w3 = 0.1 * jax.random.normal(ks[2], (CMID, COUT), jnp.float32)  # 1x1: (Cmid, Cout)

    def bn(k, c):
        k1, k2, k3, k4 = jax.random.split(k, 4)
        gamma = 1.0 + 0.1 * jax.random.normal(k1, (c,), jnp.float32)
        beta = 0.1 * jax.random.normal(k2, (c,), jnp.float32)
        mean = 0.1 * jax.random.normal(k3, (c,), jnp.float32)
        var = 1.0 + 0.5 * jax.random.uniform(k4, (c,), jnp.float32)
        return fold_bn(gamma, beta, mean, var)

    s1, b1 = bn(ks[3], CMID)
    s2, b2 = bn(ks[4], CMID)
    s3, b3 = bn(ks[5], COUT)
    return dict(w1=w1, w2=w2, w3=w3, s1=s1, b1=b1, s2=s2, b2=b2, s3=s3, b3=b3)


def prepare_kernel_params(p):
    """Host-side prep (computed once): fold BN scales into weights, fold conv1
    bias / conv3 bias+residual into MXU contractions, build small per-tap
    depthwise weights and a channel-independent edge mask."""
    w1f = p["w1"].T * p["s1"][:, None]                         # (CMID, CIN)
    w1a = jnp.concatenate([w1f, p["b1"][:, None]], axis=1)     # (CMID, CIN+1)

    w3f = p["w3"].T * p["s3"][:, None]                         # (COUT, CMID)
    w3r = jnp.concatenate([jnp.eye(COUT, dtype=jnp.float32),
                           p["b3"][:, None]], axis=1)          # (COUT, CIN+1)

    b2 = p["b2"][:, None]                                      # (CMID, 1)

    # Depthwise: per-tap per-channel weights (BN scale folded), ~1.2 KB.
    tapw = (p["w2"] * p["s2"][None, None, :]).reshape(K * K, CMID, 1)

    # Channel-independent zero-padding edge mask over the concatenated
    # (N*HW)-lane axis, ~18 KB.  Zeros every tap whose source pixel would be
    # out of the image (also kills roll wrap-around / cross-image reads).
    pos = jnp.arange(HW)
    yy, xx = pos // W, pos % W
    masks = []
    for ky in range(K):
        for kx in range(K):
            dy, dx = ky - PAD, kx - PAD
            valid = ((yy + dy >= 0) & (yy + dy < H) &
                     (xx + dx >= 0) & (xx + dx < W)).astype(jnp.float32)
            masks.append(jnp.tile(valid, N))                   # (N*HW,)
    mask = jnp.stack(masks, axis=0)[:, None, :]                # (K*K, 1, N*HW)

    return dict(w1a=w1a, tapw=tapw, mask=mask, b2=b2, w3f=w3f, w3r=w3r)


# ---------------- pure-JAX reference (for correctness check) ----------------
def ref_forward(x_nchw, p):
    dn = ("NHWC", "HWIO", "NHWC")
    x = jnp.transpose(x_nchw, (0, 2, 3, 1)).astype(jnp.float32)
    h = jax.lax.conv_general_dilated(x, p["w1"].reshape(1, 1, CIN, CMID),
                                     (1, 1), "VALID", dimension_numbers=dn)
    h = jnp.maximum(h * p["s1"] + p["b1"], 0.0)
    h = jax.lax.conv_general_dilated(h, p["w2"].reshape(K, K, 1, CMID),
                                     (1, 1), ((PAD, PAD), (PAD, PAD)),
                                     dimension_numbers=dn,
                                     feature_group_count=CMID)
    h = jnp.maximum(h * p["s2"] + p["b2"], 0.0)
    y = jax.lax.conv_general_dilated(h, p["w3"].reshape(1, 1, CMID, COUT),
                                     (1, 1), "VALID", dimension_numbers=dn)
    y = y * p["s3"] + p["b3"]
    y = y + x
    return jnp.transpose(y, (0, 3, 1, 2))


if __name__ == "__main__":
    key = jax.random.PRNGKey(0)
    kx, kp_key = jax.random.split(key)
    x = jax.random.normal(kx, (N, CIN, H, W), jnp.float32)   # NCHW like PyTorch
    params = make_params(kp_key)
    kparams = prepare_kernel_params(params)

    out = effi_inv_res_unit(x, kparams)
    out = jax.block_until_ready(out)

    ref = jax.block_until_ready(ref_forward(x, params))
    assert out.shape == (N, COUT, H, W), out.shape
    err = float(jnp.abs(out - ref).max())
    assert jnp.allclose(out, ref, rtol=1e-4, atol=1e-4), err

    print("KERNEL_OK")
</pallas_src>

<mosaic_0001>
module attributes {stable_mosaic.version = 11 : i64} {
  func.func @effi_inv_res_kernel(%arg0: i32, %arg1: memref<9x512xf32, #tpu.memory_space<vmem>>, %arg2: memref<32x9xf32, #tpu.memory_space<vmem>>, %arg3: memref<9x32x1xf32, #tpu.memory_space<vmem>>, %arg4: memref<9x1x512xf32, #tpu.memory_space<vmem>>, %arg5: memref<32x1xf32, #tpu.memory_space<vmem>>, %arg6: memref<8x32xf32, #tpu.memory_space<vmem>>, %arg7: memref<8x9xf32, #tpu.memory_space<vmem>>, %arg8: memref<8x512xf32, #tpu.memory_space<vmem>>) attributes {dimension_semantics = [#tpu.dimension_semantics<arbitrary>], iteration_bounds = array<i64: 1>, scalar_prefetch = 0 : i64, scratch_operands = 0 : i64, tpu.core_type = #tpu.core_type<tc>, window_params = [{pipeline_mode = #tpu.pipeline_mode<synchronous>, transform_indices = @transform_0, window_bounds = array<i64: 9, 512>}, {pipeline_mode = #tpu.pipeline_mode<synchronous>, transform_indices = @transform_1, window_bounds = array<i64: 32, 9>}, {pipeline_mode = #tpu.pipeline_mode<synchronous>, transform_indices = @transform_2, window_bounds = array<i64: 9, 32, 1>}, {pipeline_mode = #tpu.pipeline_mode<synchronous>, transform_indices = @transform_3, window_bounds = array<i64: 9, 1, 512>}, {pipeline_mode = #tpu.pipeline_mode<synchronous>, transform_indices = @transform_4, window_bounds = array<i64: 32, 1>}, {pipeline_mode = #tpu.pipeline_mode<synchronous>, transform_indices = @transform_5, window_bounds = array<i64: 8, 32>}, {pipeline_mode = #tpu.pipeline_mode<synchronous>, transform_indices = @transform_6, window_bounds = array<i64: 8, 9>}, {pipeline_mode = #tpu.pipeline_mode<synchronous>, transform_indices = @transform_7, window_bounds = array<i64: 8, 512>}]} {
    %c0 = arith.constant 0 : index
    %c0_0 = arith.constant 0 : index
    %0 = vector.load %arg2[%c0, %c0_0] : memref<32x9xf32, #tpu.memory_space<vmem>>, vector<32x9xf32>
    %c0_1 = arith.constant 0 : index
    %c0_2 = arith.constant 0 : index
    %1 = vector.load %arg1[%c0_1, %c0_2] : memref<9x512xf32, #tpu.memory_space<vmem>>, vector<9x512xf32>
    %cst = arith.constant dense<0.000000e+00> : vector<32x512xf32>
    %2 = tpu.matmul %0, %1, %cst {dimension_numbers = #tpu.dot_dimension_numbers<[1], [0], [0], [1], [0, 0, 1, 1], [], []>} : vector<32x9xf32>, vector<9x512xf32>, vector<32x512xf32> -> vector<32x512xf32>
    %cst_3 = arith.constant 0.000000e+00 : f32
    %3 = vector.broadcast %cst_3 : f32 to vector<32x512xf32>
    %4 = arith.maximumf %2, %3 : vector<32x512xf32>
    %c4 = arith.constant 4 : index
    %c0_4 = arith.constant 0 : index
    %c0_5 = arith.constant 0 : index
    %5 = vector.load %arg3[%c4, %c0_4, %c0_5] : memref<9x32x1xf32, #tpu.memory_space<vmem>>, vector<1x32x1xf32>
    %6 = vector.shape_cast %5 : vector<1x32x1xf32> to vector<32x1xf32>
    %7 = vector.broadcast %6 : vector<32x1xf32> to vector<32x512xf32>
    %8 = arith.mulf %4, %7 : vector<32x512xf32>
    %c0_6 = arith.constant 0 : index
    %c0_7 = arith.constant 0 : index
    %9 = vector.load %arg5[%c0_6, %c0_7] : memref<32x1xf32, #tpu.memory_space<vmem>>, vector<32x1xf32>
    %10 = vector.broadcast %9 : vector<32x1xf32> to vector<32x512xf32>
    %11 = arith.addf %8, %10 : vector<32x512xf32>
    %c17_i32 = arith.constant 17 : i32
    %12 = tpu.dynamic_rotate %4 by %c17_i32 dim 1 : vector<32x512xf32>, i32 -> vector<32x512xf32>
    %c0_8 = arith.constant 0 : index
    %c0_9 = arith.constant 0 : index
    %c0_10 = arith.constant 0 : index
    %13 = vector.load %arg3[%c0_8, %c0_9, %c0_10] : memref<9x32x1xf32, #tpu.memory_space<vmem>>, vector<1x32x1xf32>
    %14 = vector.shape_cast %13 : vector<1x32x1xf32> to vector<32x1xf32>
    %15 = vector.broadcast %14 : vector<32x1xf32> to vector<32x512xf32>
    %16 = arith.mulf %12, %15 : vector<32x512xf32>
    %c0_11 = arith.constant 0 : index
    %c0_12 = arith.constant 0 : index
    %c0_13 = arith.constant 0 : index
    %17 = vector.load %arg4[%c0_11, %c0_12, %c0_13] : memref<9x1x512xf32, #tpu.memory_space<vmem>>, vector<1x1x512xf32>
    %18 = vector.shape_cast %17 : vector<1x1x512xf32> to vector<1x512xf32>
    %19 = vector.broadcast %18 : vector<1x512xf32> to vector<32x512xf32>
    %20 = arith.mulf %16, %19 : vector<32x512xf32>
    %21 = arith.addf %11, %20 : vector<32x512xf32>
    %c16_i32 = arith.constant 16 : i32
    %22 = tpu.dynamic_rotate %4 by %c16_i32 dim 1 : vector<32x512xf32>, i32 -> vector<32x512xf32>
    %c1 = arith.constant 1 : index
    %c0_14 = arith.constant 0 : index
    %c0_15 = arith.constant 0 : index
    %23 = vector.load %arg3[%c1, %c0_14, %c0_15] : memref<9x32x1xf32, #tpu.memory_space<vmem>>, vector<1x32x1xf32>
    %24 = vector.shape_cast %23 : vector<1x32x1xf32> to vector<32x1xf32>
    %25 = vector.broadcast %24 : vector<32x1xf32> to vector<32x512xf32>
    %26 = arith.mulf %22, %25 : vector<32x512xf32>
    %c1_16 = arith.constant 1 : index
    %c0_17 = arith.constant 0 : index
    %c0_18 = arith.constant 0 : index
    %27 = vector.load %arg4[%c1_16, %c0_17, %c0_18] : memref<9x1x512xf32, #tpu.memory_space<vmem>>, vector<1x1x512xf32>
    %28 = vector.shape_cast %27 : vector<1x1x512xf32> to vector<1x512xf32>
    %29 = vector.broadcast %28 : vector<1x512xf32> to vector<32x512xf32>
    %30 = arith.mulf %26, %29 : vector<32x512xf32>
    %31 = arith.addf %21, %30 : vector<32x512xf32>
    %c15_i32 = arith.constant 15 : i32
    %32 = tpu.dynamic_rotate %4 by %c15_i32 dim 1 : vector<32x512xf32>, i32 -> vector<32x512xf32>
    %c2 = arith.constant 2 : index
    %c0_19 = arith.constant 0 : index
    %c0_20 = arith.constant 0 : index
    %33 = vector.load %arg3[%c2, %c0_19, %c0_20] : memref<9x32x1xf32, #tpu.memory_space<vmem>>, vector<1x32x1xf32>
    %34 = vector.shape_cast %33 : vector<1x32x1xf32> to vector<32x1xf32>
    %35 = vector.broadcast %34 : vector<32x1xf32> to vector<32x512xf32>
    %36 = arith.mulf %32, %35 : vector<32x512xf32>
    %c2_21 = arith.constant 2 : index
    %c0_22 = arith.constant 0 : index
    %c0_23 = arith.constant 0 : index
    %37 = vector.load %arg4[%c2_21, %c0_22, %c0_23] : memref<9x1x512xf32, #tpu.memory_space<vmem>>, vector<1x1x512xf32>
    %38 = vector.shape_cast %37 : vector<1x1x512xf32> to vector<1x512xf32>
    %39 = vector.broadcast %38 : vector<1x512xf32> to vector<32x512xf32>
    %40 = arith.mulf %36, %39 : vector<32x512xf32>
    %41 = arith.addf %31, %40 : vector<32x512xf32>
    %c1_i32 = arith.constant 1 : i32
    %42 = tpu.dynamic_rotate %4 by %c1_i32 dim 1 : vector<32x512xf32>, i32 -> vector<32x512xf32>
    %c3 = arith.constant 3 : index
    %c0_24 = arith.constant 0 : index
    %c0_25 = arith.constant 0 : index
    %43 = vector.load %arg3[%c3, %c0_24, %c0_25] : memref<9x32x1xf32, #tpu.memory_space<vmem>>, vector<1x32x1xf32>
    %44 = vector.shape_cast %43 : vector<1x32x1xf32> to vector<32x1xf32>
    %45 = vector.broadcast %44 : vector<32x1xf32> to vector<32x512xf32>
    %46 = arith.mulf %42, %45 : vector<32x512xf32>
    %c3_26 = arith.constant 3 : index
    %c0_27 = arith.constant 0 : index
    %c0_28 = arith.constant 0 : index
    %47 = vector.load %arg4[%c3_26, %c0_27, %c0_28] : memref<9x1x512xf32, #tpu.memory_space<vmem>>, vector<1x1x512xf32>
    %48 = vector.shape_cast %47 : vector<1x1x512xf32> to vector<1x512xf32>
    %49 = vector.broadcast %48 : vector<1x512xf32> to vector<32x512xf32>
    %50 = arith.mulf %46, %49 : vector<32x512xf32>
    %51 = arith.addf %41, %50 : vector<32x512xf32>
    %c511_i32 = arith.constant 511 : i32
    %52 = tpu.dynamic_rotate %4 by %c511_i32 dim 1 : vector<32x512xf32>, i32 -> vector<32x512xf32>
    %c5 = arith.constant 5 : index
    %c0_29 = arith.constant 0 : index
    %c0_30 = arith.constant 0 : index
    %53 = vector.load %arg3[%c5, %c0_29, %c0_30] : memref<9x32x1xf32, #tpu.memory_space<vmem>>, vector<1x32x1xf32>
    %54 = vector.shape_cast %53 : vector<1x32x1xf32> to vector<32x1xf32>
    %55 = vector.broadcast %54 : vector<32x1xf32> to vector<32x512xf32>
    %56 = arith.mulf %52, %55 : vector<32x512xf32>
    %c5_31 = arith.constant 5 : index
    %c0_32 = arith.constant 0 : index
    %c0_33 = arith.constant 0 : index
    %57 = vector.load %arg4[%c5_31, %c0_32, %c0_33] : memref<9x1x512xf32, #tpu.memory_space<vmem>>, vector<1x1x512xf32>
    %58 = vector.shape_cast %57 : vector<1x1x512xf32> to vector<1x512xf32>
    %59 = vector.broadcast %58 : vector<1x512xf32> to vector<32x512xf32>
    %60 = arith.mulf %56, %59 : vector<32x512xf32>
    %61 = arith.addf %51, %60 : vector<32x512xf32>
    %c497_i32 = arith.constant 497 : i32
    %62 = tpu.dynamic_rotate %4 by %c497_i32 dim 1 : vector<32x512xf32>, i32 -> vector<32x512xf32>
    %c6 = arith.constant 6 : index
    %c0_34 = arith.constant 0 : index
    %c0_35 = arith.constant 0 : index
    %63 = vector.load %arg3[%c6, %c0_34, %c0_35] : memref<9x32x1xf32, #tpu.memory_space<vmem>>, vector<1x32x1xf32>
    %64 = vector.shape_cast %63 : vector<1x32x1xf32> to vector<32x1xf32>
    %65 = vector.broadcast %64 : vector<32x1xf32> to vector<32x512xf32>
    %66 = arith.mulf %62, %65 : vector<32x512xf32>
    %c6_36 = arith.constant 6 : index
    %c0_37 = arith.constant 0 : index
    %c0_38 = arith.constant 0 : index
    %67 = vector.load %arg4[%c6_36, %c0_37, %c0_38] : memref<9x1x512xf32, #tpu.memory_space<vmem>>, vector<1x1x512xf32>
    %68 = vector.shape_cast %67 : vector<1x1x512xf32> to vector<1x512xf32>
    %69 = vector.broadcast %68 : vector<1x512xf32> to vector<32x512xf32>
    %70 = arith.mulf %66, %69 : vector<32x512xf32>
    %71 = arith.addf %61, %70 : vector<32x512xf32>
    %c496_i32 = arith.constant 496 : i32
    %72 = tpu.dynamic_rotate %4 by %c496_i32 dim 1 : vector<32x512xf32>, i32 -> vector<32x512xf32>
    %c7 = arith.constant 7 : index
    %c0_39 = arith.constant 0 : index
    %c0_40 = arith.constant 0 : index
    %73 = vector.load %arg3[%c7, %c0_39, %c0_40] : memref<9x32x1xf32, #tpu.memory_space<vmem>>, vector<1x32x1xf32>
    %74 = vector.shape_cast %73 : vector<1x32x1xf32> to vector<32x1xf32>
    %75 = vector.broadcast %74 : vector<32x1xf32> to vector<32x512xf32>
    %76 = arith.mulf %72, %75 : vector<32x512xf32>
    %c7_41 = arith.constant 7 : index
    %c0_42 = arith.constant 0 : index
    %c0_43 = arith.constant 0 : index
    %77 = vector.load %arg4[%c7_41, %c0_42, %c0_43] : memref<9x1x512xf32, #tpu.memory_space<vmem>>, vector<1x1x512xf32>
    %78 = vector.shape_cast %77 : vector<1x1x512xf32> to vector<1x512xf32>
    %79 = vector.broadcast %78 : vector<1x512xf32> to vector<32x512xf32>
    %80 = arith.mulf %76, %79 : vector<32x512xf32>
    %81 = arith.addf %71, %80 : vector<32x512xf32>
    %c495_i32 = arith.constant 495 : i32
    %82 = tpu.dynamic_rotate %4 by %c495_i32 dim 1 : vector<32x512xf32>, i32 -> vector<32x512xf32>
    %c8 = arith.constant 8 : index
    %c0_44 = arith.constant 0 : index
    %c0_45 = arith.constant 0 : index
    %83 = vector.load %arg3[%c8, %c0_44, %c0_45] : memref<9x32x1xf32, #tpu.memory_space<vmem>>, vector<1x32x1xf32>
    %84 = vector.shape_cast %83 : vector<1x32x1xf32> to vector<32x1xf32>
    %85 = vector.broadcast %84 : vector<32x1xf32> to vector<32x512xf32>
    %86 = arith.mulf %82, %85 : vector<32x512xf32>
    %c8_46 = arith.constant 8 : index
    %c0_47 = arith.constant 0 : index
    %c0_48 = arith.constant 0 : index
    %87 = vector.load %arg4[%c8_46, %c0_47, %c0_48] : memref<9x1x512xf32, #tpu.memory_space<vmem>>, vector<1x1x512xf32>
    %88 = vector.shape_cast %87 : vector<1x1x512xf32> to vector<1x512xf32>
    %89 = vector.broadcast %88 : vector<1x512xf32> to vector<32x512xf32>
    %90 = arith.mulf %86, %89 : vector<32x512xf32>
    %91 = arith.addf %81, %90 : vector<32x512xf32>
    %cst_49 = arith.constant 0.000000e+00 : f32
    %92 = vector.broadcast %cst_49 : f32 to vector<32x512xf32>
    %93 = arith.maximumf %91, %92 : vector<32x512xf32>
    %c0_50 = arith.constant 0 : index
    %c0_51 = arith.constant 0 : index
    %94 = vector.load %arg6[%c0_50, %c0_51] : memref<8x32xf32, #tpu.memory_space<vmem>>, vector<8x32xf32>
    %cst_52 = arith.constant dense<0.000000e+00> : vector<8x512xf32>
    %95 = tpu.matmul %94, %93, %cst_52 {dimension_numbers = #tpu.dot_dimension_numbers<[1], [0], [0], [1], [0, 0, 1, 1], [], []>} : vector<8x32xf32>, vector<32x512xf32>, vector<8x512xf32> -> vector<8x512xf32>
    %c0_53 = arith.constant 0 : index
    %c0_54 = arith.constant 0 : index
    %96 = vector.load %arg7[%c0_53, %c0_54] : memref<8x9xf32, #tpu.memory_space<vmem>>, vector<8x9xf32>
    %c0_55 = arith.constant 0 : index
    %c0_56 = arith.constant 0 : index
    %97 = vector.load %arg1[%c0_55, %c0_56] : memref<9x512xf32, #tpu.memory_space<vmem>>, vector<9x512xf32>
    %cst_57 = arith.constant dense<0.000000e+00> : vector<8x512xf32>
    %98 = tpu.matmul %96, %97, %cst_57 {dimension_numbers = #tpu.dot_dimension_numbers<[1], [0], [0], [1], [0, 0, 1, 1], [], []>} : vector<8x9xf32>, vector<9x512xf32>, vector<8x512xf32> -> vector<8x512xf32>
    %99 = arith.addf %95, %98 : vector<8x512xf32>
    %c0_58 = arith.constant 0 : index
    %c0_59 = arith.constant 0 : index
    %100 = vector.load %arg8[%c0_58, %c0_59] : memref<8x512xf32, #tpu.memory_space<vmem>>, vector<8x512xf32>
    tpu.vector_store %arg8[%c0_58, %c0_59], %99 {strides = array<i32>} : memref<8x512xf32, #tpu.memory_space<vmem>>, vector<8x512xf32>,
    return
  }
  func.func @transform_0(%arg0: i32) -> (i32, i32) {
    %c0_i32 = arith.constant 0 : i32
    %c0_i32_0 = arith.constant 0 : i32
    %c0_i32_1 = arith.constant 0 : i32
    return %c0_i32, %c0_i32_0 : i32, i32
  }
  func.func @transform_1(%arg0: i32) -> (i32, i32) {
    %c0_i32 = arith.constant 0 : i32
    %c0_i32_0 = arith.constant 0 : i32
    %c0_i32_1 = arith.constant 0 : i32
    return %c0_i32, %c0_i32_0 : i32, i32
  }
  func.func @transform_2(%arg0: i32) -> (i32, i32, i32) {
    %c0_i32 = arith.constant 0 : i32
    %c0_i32_0 = arith.constant 0 : i32
    %c0_i32_1 = arith.constant 0 : i32
    %c0_i32_2 = arith.constant 0 : i32
    return %c0_i32, %c0_i32_0, %c0_i32_1 : i32, i32, i32
  }
  func.func @transform_3(%arg0: i32) -> (i32, i32, i32) {
    %c0_i32 = arith.constant 0 : i32
    %c0_i32_0 = arith.constant 0 : i32
    %c0_i32_1 = arith.constant 0 : i32
    %c0_i32_2 = arith.constant 0 : i32
    return %c0_i32, %c0_i32_0, %c0_i32_1 : i32, i32, i32
  }
  func.func @transform_4(%arg0: i32) -> (i32, i32) {
    %c0_i32 = arith.constant 0 : i32
    %c0_i32_0 = arith.constant 0 : i32
    %c0_i32_1 = arith.constant 0 : i32
    return %c0_i32, %c0_i32_0 : i32, i32
  }
  func.func @transform_5(%arg0: i32) -> (i32, i32) {
    %c0_i32 = arith.constant 0 : i32
    %c0_i32_0 = arith.constant 0 : i32
    %c0_i32_1 = arith.constant 0 : i32
    return %c0_i32, %c0_i32_0 : i32, i32
  }
  func.func @transform_6(%arg0: i32) -> (i32, i32) {
    %c0_i32 = arith.constant 0 : i32
    %c0_i32_0 = arith.constant 0 : i32
    %c0_i32_1 = arith.constant 0 : i32
    return %c0_i32, %c0_i32_0 : i32, i32
  }
  func.func @transform_7(%arg0: i32) -> (i32, i32) {
    %c0_i32 = arith.constant 0 : i32
    %c0_i32_0 = arith.constant 0 : i32
    %c0_i32_1 = arith.constant 0 : i32
    return %c0_i32, %c0_i32_0 : i32, i32
  }
}

</mosaic_0001>

<llo_original>
// kernel: tpu_custom_call.1
$region0: #{tpu_custom_call.1}
  #allocation0 [shape = 'u32[]', space=smem, size = 0x4, offset = 0x4, fixed_abs, tag = 'smem constant byte address 0x4 - core index']
  #allocation1 [shape = 'u32[144,128]{1,0:T(1,128)}', space=vmem, size = 0x12000, scoped, tag = 'internal scratch']
  %s0 = inlined_call_operand.vmem [shape: f32[9,512], index: 0, kind: input, shape index: {}]
  %s1 = inlined_call_operand.vmem [shape: f32[32,9], index: 1, kind: input, shape index: {}]
  %s2 = inlined_call_operand.vmem [shape: f32[9,32,1], index: 2, kind: input, shape index: {}]
  %s3 = inlined_call_operand.vmem [shape: f32[9,1,512], index: 3, kind: input, shape index: {}]
  %s4 = inlined_call_operand.vmem [shape: f32[32,1], index: 4, kind: input, shape index: {}]
  %s5 = inlined_call_operand.vmem [shape: f32[8,32], index: 5, kind: input, shape index: {}]
  %s6 = inlined_call_operand.vmem [shape: f32[8,9], index: 6, kind: input, shape index: {}]
  %s7 = inlined_call_operand.hbm [shape: f32[8,512], index: 7, kind: output, shape index: {}]
  %s8 = sld [smem:[#allocation0]]
  $region38: #{tpu_custom_call.1} parent=0
    _
  %s10 = ssub.s32 1, %s8
  %s11 = scalar_select 0, %s10, %s8
  $region1: #{tpu_custom_call.1} parent=0
    #allocation2 [shape = 'u8[16384]{0}', space=vmem, size = 0x4000, scoped, tag = 'output window, operand 0, single buffered']
    #allocation3 [shape = 's32[1]{0}', space=sflag, size = 0x4, scoped, tag = 'scoped memory for tpu_custom_call.1']
    %12 = vsyncpa [#allocation3], 0
    // Predicated region
    $region2: #{tpu_custom_call.1} parent=1 // pred_check
      _
    $region3: #{tpu_custom_call.1} parent=1 // pred_check_branch
      %14 = sbr.rel (0) target = $region5
    $region4: #{tpu_custom_call.1} parent=1 // pred_region
      _
    $region5: #{tpu_custom_call.1} parent=1 // pred_fallthru
      _
    // Predicated region
    $region6: #{tpu_custom_call.1} parent=1 // pred_check
      _
    $region7: #{tpu_custom_call.1} parent=1 // pred_check_branch
      %16 = sbr.rel (0) target = $region9
    $region8: #{tpu_custom_call.1} parent=1 // pred_region
      _
    $region9: #{tpu_custom_call.1} parent=1 // pred_fallthru
      _
    // Predicated region
    $region10: #{tpu_custom_call.1} parent=1 // pred_check
      _
    $region11: #{tpu_custom_call.1} parent=1 // pred_check_branch
      %18 = sbr.rel (0) target = $region13
    $region12: #{tpu_custom_call.1} parent=1 // pred_region
      _
    $region13: #{tpu_custom_call.1} parent=1 // pred_fallthru
      _
    // Predicated region
    $region14: #{tpu_custom_call.1} parent=1 // pred_check
      _
    $region15: #{tpu_custom_call.1} parent=1 // pred_check_branch
      %20 = sbr.rel (0) target = $region17
    $region16: #{tpu_custom_call.1} parent=1 // pred_region
      _
    $region17: #{tpu_custom_call.1} parent=1 // pred_fallthru
      _
    // Predicated region
    $region18: #{tpu_custom_call.1} parent=1 // pred_check
      _
    $region19: #{tpu_custom_call.1} parent=1 // pred_check_branch
      %22 = sbr.rel (0) target = $region21
    $region20: #{tpu_custom_call.1} parent=1 // pred_region
      _
    $region21: #{tpu_custom_call.1} parent=1 // pred_fallthru
      _
    // Predicated region
    $region22: #{tpu_custom_call.1} parent=1 // pred_check
      _
    $region23: #{tpu_custom_call.1} parent=1 // pred_check_branch
      %24 = sbr.rel (0) target = $region25
    $region24: #{tpu_custom_call.1} parent=1 // pred_region
      _
    $region25: #{tpu_custom_call.1} parent=1 // pred_fallthru
      _
    // Predicated region
    $region26: #{tpu_custom_call.1} parent=1 // pred_check
      _
    $region27: #{tpu_custom_call.1} parent=1 // pred_check_branch
      %26 = sbr.rel (0) target = $region29
    $region28: #{tpu_custom_call.1} parent=1 // pred_region
      _
    $region29: #{tpu_custom_call.1} parent=1 // pred_fallthru
      _
    %v27 = vld [vmem:[%s1] sm:$0xff]
    %v28 = vld [vmem:[%s1 + $0x8] sm:$0xff]
    %v29 = vld [vmem:[%s1 + $0x10] sm:$0xff]
    %v30 = vld [vmem:[%s1 + $0x18] sm:$0xff]
    %v31 = vld [vmem:[%s0] sm:$0xff]
    %v32 = vld [vmem:[%s0 + $0x8] sm:$0xff]
    %v33 = vld [vmem:[%s0 + $0x10] sm:$0xff]
    %v34 = vld [vmem:[%s0 + $0x18] sm:$0xff]
    %v35 = vld [vmem:[%s0 + $0x20] sm:$0x1]
    %v36 = vld [vmem:[%s0 + $0x28] sm:$0x1]
    %v37 = vld [vmem:[%s0 + $0x30] sm:$0x1]
    %v38 = vld [vmem:[%s0 + $0x38] sm:$0x1]
    %vm39 = vcmask 72704
    %v41 = vsel %vm39, %v27, 0
    %v44 = vsel %vm39, %v28, 0
    %v47 = vsel %vm39, %v29, 0
    %v50 = vsel %vm39, %v30, 0
    %vm52 = vcmask 1040384
    %v54 = vsel %vm52, %v35, 0
    %v57 = vsel %vm52, %v36, 0
    %v60 = vsel %vm52, %v37, 0
    %v63 = vsel %vm52, %v38, 0
    %65 = vmatprep.subr.mxu0 0.0
    %66 = vmatpush1.msra.mxu0 0.0
    %67 = vmatprep.subr.mxu0 0.0
    %68 = vmatpush1.msra.mxu0 0.0
    %69 = vmatprep.subr.mxu0 0.0
    %70 = vmatpush1.msra.mxu0 0.0
    %71 = vmatprep.subr.mxu0 0.0
    %72 = vmatpush1.msra.mxu0 0.0
    %73 = vmatprep.subr.mxu0 0.0
    %74 = vmatpush1.msra.mxu0 0.0
    %75 = vmatprep.subr.mxu0 0.0
    %76 = vmatpush1.msra.mxu0 0.0
    %77 = vmatprep.subr.mxu0 0.0
    %78 = vmatpush1.msra.mxu0 0.0
    %79 = vmatprep.subr.mxu0 0.0
    %80 = vmatpush1.msra.mxu0 0.0
    %81 = vmatprep.subr.mxu0 0.0
    %82 = vmatpush1.msra.mxu0 0.0
    %83 = vmatprep.subr.mxu0 0.0
    %84 = vmatpush1.msra.mxu0 0.0
    %85 = vmatprep.subr.mxu0 0.0
    %86 = vmatpush1.msra.mxu0 0.0
    %87 = vmatprep.subr.mxu0 0.0
    %88 = vmatpush1.msra.mxu0 0.0
    %89 = vmatprep.subr.mxu0 0.0
    %90 = vmatpush1.msra.mxu0 0.0
    %91 = vmatprep.subr.mxu0 0.0
    %92 = vmatpush1.msra.mxu0 0.0
    %93 = vmatprep.subr.mxu0 %v57
    %94 = vmatpush1.msra.mxu0 %v54
    %95 = vmatprep.subr.mxu0 %v32
    %96 = vmatpush1.msra.mxu0 %v31
    %97 = vmatprep.subr.mxu0 0.0
    %98 = vmatpush2.msra.mxu0 0.0
    %99 = vmatprep.subr.mxu0 0.0
    %100 = vmatpush2.msra.mxu0 0.0
    %101 = vmatprep.subr.mxu0 0.0
    %102 = vmatpush2.msra.mxu0 0.0
    %103 = vmatprep.subr.mxu0 0.0
    %104 = vmatpush2.msra.mxu0 0.0
    %105 = vmatprep.subr.mxu0 0.0
    %106 = vmatpush2.msra.mxu0 0.0
    %107 = vmatprep.subr.mxu0 0.0
    %108 = vmatpush2.msra.mxu0 0.0
    %109 = vmatprep.subr.mxu0 0.0
    %110 = vmatpush2.msra.mxu0 0.0
    %111 = vmatprep.subr.mxu0 0.0
    %112 = vmatpush2.msra.mxu0 0.0
    %113 = vmatprep.subr.mxu0 0.0
    %114 = vmatpush2.msra.mxu0 0.0
    %115 = vmatprep.subr.mxu0 0.0
    %116 = vmatpush2.msra.mxu0 0.0
    %117 = vmatprep.subr.mxu0 0.0
    %118 = vmatpush2.msra.mxu0 0.0
    %119 = vmatprep.subr.mxu0 0.0
    %120 = vmatpush2.msra.mxu0 0.0
    %121 = vmatprep.subr.mxu0 0.0
    %122 = vmatpush2.msra.mxu0 0.0
    %123 = vmatprep.subr.mxu0 0.0
    %124 = vmatpush2.msra.mxu0 0.0
    %125 = vmatprep.subr.mxu0 0.0
    %126 = vmatpush2.msra.mxu0 0.0
    %127 = vmatprep.subr.mxu0 0.0
    %128 = vmatpush2.msra.mxu0 0.0
    %129 = vmatprep.mubr.f32.mxu0 0.0
    %130 = vmatmul.mubr.f32.gmra.mxu0 %v41
    %v131 = vpop.f32.mrf.mxu0
    %v132 = vadd.f32 0.0, %v131
    %v133 = vpop.f32.mrf.mxu0
    %v134 = vadd.f32 0.0, %v133
    %135 = vmatprep.mubr.f32.mxu0 0.0
    %136 = vmatmul.mubr.f32.gmra.mxu0 %v44
    %v137 = vpop.f32.mrf.mxu0
    %v138 = vadd.f32 0.0, %v137
    %v139 = vpop.f32.mrf.mxu0
    %v140 = vadd.f32 0.0, %v139
    %141 = vmatprep.mubr.f32.mxu0 0.0
    %142 = vmatmul.mubr.f32.gmra.mxu0 %v47
    %v143 = vpop.f32.mrf.mxu0
    %v144 = vadd.f32 0.0, %v143
    %v145 = vpop.f32.mrf.mxu0
    %v146 = vadd.f32 0.0, %v145
    %147 = vmatprep.mubr.f32.mxu0 0.0
    %148 = vmatmul.mubr.f32.gmra.mxu0 %v50
    %v149 = vpop.f32.mrf.mxu0
    %v150 = vadd.f32 0.0, %v149
    %v151 = vpop.f32.mrf.mxu0
    %v152 = vadd.f32 0.0, %v151
    %153 = vdwg.mxu0
    %154 = vmatprep.subr.mxu0 0.0
    %155 = vmatpush1.msra.mxu0 0.0
    %156 = vmatprep.subr.mxu0 0.0
    %157 = vmatpush1.msra.mxu0 0.0
    %158 = vmatprep.subr.mxu0 0.0
    %159 = vmatpush1.msra.mxu0 0.0
    %160 = vmatprep.subr.mxu0 0.0
    %161 = vmatpush1.msra.mxu0 0.0
    %162 = vmatprep.subr.mxu0 0.0
    %163 = vmatpush1.msra.mxu0 0.0
    %164 = vmatprep.subr.mxu0 0.0
    %165 = vmatpush1.msra.mxu0 0.0
    %166 = vmatprep.subr.mxu0 0.0
    %167 = vmatpush1.msra.mxu0 0.0
    %168 = vmatprep.subr.mxu0 0.0
    %169 = vmatpush1.msra.mxu0 0.0
    %170 = vmatprep.subr.mxu0 0.0
    %171 = vmatpush1.msra.mxu0 0.0
    %172 = vmatprep.subr.mxu0 0.0
    %173 = vmatpush1.msra.mxu0 0.0
    %174 = vmatprep.subr.mxu0 0.0
    %175 = vmatpush1.msra.mxu0 0.0
    %176 = vmatprep.subr.mxu0 0.0
    %177 = vmatpush1.msra.mxu0 0.0
    %178 = vmatprep.subr.mxu0 0.0
    %179 = vmatpush1.msra.mxu0 0.0
    %180 = vmatprep.subr.mxu0 0.0
    %181 = vmatpush1.msra.mxu0 0.0
    %182 = vmatprep.subr.mxu0 %v63
    %183 = vmatpush1.msra.mxu0 %v60
    %184 = vmatprep.subr.mxu0 %v34
    %185 = vmatpush1.msra.mxu0 %v33
    %186 = vmatprep.subr.mxu0 0.0
    %187 = vmatpush2.msra.mxu0 0.0
    %188 = vmatprep.subr.mxu0 0.0
    %189 = vmatpush2.msra.mxu0 0.0
    %190 = vmatprep.subr.mxu0 0.0
    %191 = vmatpush2.msra.mxu0 0.0
    %192 = vmatprep.subr.mxu0 0.0
    %193 = vmatpush2.msra.mxu0 0.0
    %194 = vmatprep.subr.mxu0 0.0
    %195 = vmatpush2.msra.mxu0 0.0
    %196 = vmatprep.subr.mxu0 0.0
    %197 = vmatpush2.msra.mxu0 0.0
    %198 = vmatprep.subr.mxu0 0.0
    %199 = vmatpush2.msra.mxu0 0.0
    %200 = vmatprep.subr.mxu0 0.0
    %201 = vmatpush2.msra.mxu0 0.0
    %202 = vmatprep.subr.mxu0 0.0
    %203 = vmatpush2.msra.mxu0 0.0
    %204 = vmatprep.subr.mxu0 0.0
    %205 = vmatpush2.msra.mxu0 0.0
    %206 = vmatprep.subr.mxu0 0.0
    %207 = vmatpush2.msra.mxu0 0.0
    %208 = vmatprep.subr.mxu0 0.0
    %209 = vmatpush2.msra.mxu0 0.0
    %210 = vmatprep.subr.mxu0 0.0
    %211 = vmatpush2.msra.mxu0 0.0
    %212 = vmatprep.subr.mxu0 0.0
    %213 = vmatpush2.msra.mxu0 0.0
    %214 = vmatprep.subr.mxu0 0.0
    %215 = vmatpush2.msra.mxu0 0.0
    %216 = vmatprep.subr.mxu0 0.0
    %217 = vmatpush2.msra.mxu0 0.0
    %218 = vmatprep.mubr.f32.mxu0 0.0
    %219 = vmatmul.mubr.f32.gmra.mxu0 %v41
    %v220 = vpop.f32.mrf.mxu0
    %v221 = vadd.f32 0.0, %v220
    %v222 = vpop.f32.mrf.mxu0
    %v223 = vadd.f32 0.0, %v222
    %224 = vmatprep.mubr.f32.mxu0 0.0
    %225 = vmatmul.mubr.f32.gmra.mxu0 %v44
    %v226 = vpop.f32.mrf.mxu0
    %v227 = vadd.f32 0.0, %v226
    %v228 = vpop.f32.mrf.mxu0
    %v229 = vadd.f32 0.0, %v228
    %230 = vmatprep.mubr.f32.mxu0 0.0
    %231 = vmatmul.mubr.f32.gmra.mxu0 %v47
    %v232 = vpop.f32.mrf.mxu0
    %v233 = vadd.f32 0.0, %v232
    %v234 = vpop.f32.mrf.mxu0
    %v235 = vadd.f32 0.0, %v234
    %236 = vmatprep.mubr.f32.mxu0 0.0
    %237 = vmatmul.mubr.f32.gmra.mxu0 %v50
    %v238 = vpop.f32.mrf.mxu0
    %v239 = vadd.f32 0.0, %v238
    %v240 = vpop.f32.mrf.mxu0
    %v241 = vadd.f32 0.0, %v240
    %242 = vdwg.mxu0
    %v243 = vmax.f32 %v132, 0.0
    %v244 = vmax.f32 %v134, 0.0
    %v245 = vmax.f32 %v221, 0.0
    %v246 = vmax.f32 %v223, 0.0
    %v247 = vmax.f32 %v138, 0.0
    %v248 = vmax.f32 %v140, 0.0
    %v249 = vmax.f32 %v227, 0.0
    %v250 = vmax.f32 %v229, 0.0
    %v251 = vmax.f32 %v144, 0.0
    %v252 = vmax.f32 %v146, 0.0
    %v253 = vmax.f32 %v233, 0.0
    %v254 = vmax.f32 %v235, 0.0
    %v255 = vmax.f32 %v150, 0.0
    %v256 = vmax.f32 %v152, 0.0
    %v257 = vmax.f32 %v239, 0.0
    %v258 = vmax.f32 %v241, 0.0
    %s259 = scalar_lea.vmem %s2, 128
    %v260 = vld [vmem:[%s259] sm:$0xff]
    %v261 = vld [vmem:[%s259 + $0x8] sm:$0xff]
    %v262 = vld [vmem:[%s259 + $0x10] sm:$0xff]
    %v263 = vld [vmem:[%s259 + $0x18] sm:$0xff]
    %265 = vset.pattern.permute.xlu0 0
    %266 = vperm.xlu0 %265, %v260
    %v267 = vpop.permute.xlu0 %266
    %270 = vset.pattern.permute.xlu0 0
    %271 = vperm.xlu0 %270, %v261
    %v272 = vpop.permute.xlu0 %271
    %275 = vset.pattern.permute.xlu0 0
    %276 = vperm.xlu0 %275, %v262
    %v277 = vpop.permute.xlu0 %276
    %280 = vset.pattern.permute.xlu0 0
    %281 = vperm.xlu0 %280, %v263
    %v282 = vpop.permute.xlu0 %281
    %v284 = vmul.f32 %v243, %v267
    %v285 = vmul.f32 %v244, %v267
    %v286 = vmul.f32 %v245, %v267
    %v287 = vmul.f32 %v246, %v267
    %v288 = vmul.f32 %v247, %v272
    %v289 = vmul.f32 %v248, %v272
    %v290 = vmul.f32 %v249, %v272
    %v291 = vmul.f32 %v250, %v272
    %v292 = vmul.f32 %v251, %v277
    %v293 = vmul.f32 %v252, %v277
    %v294 = vmul.f32 %v253, %v277
    %v295 = vmul.f32 %v254, %v277
    %v296 = vmul.f32 %v255, %v282
    %v297 = vmul.f32 %v256, %v282
    %v298 = vmul.f32 %v257, %v282
    %v299 = vmul.f32 %v258, %v282
    %v300 = vld [vmem:[%s4] sm:$0xff]
    %v301 = vld [vmem:[%s4 + $0x8] sm:$0xff]
    %v302 = vld [vmem:[%s4 + $0x10] sm:$0xff]
    %v303 = vld [vmem:[%s4 + $0x18] sm:$0xff]
    %305 = vset.pattern.permute.xlu0 0
    %306 = vperm.xlu0 %305, %v300
    %v307 = vpop.permute.xlu0 %306
    %310 = vset.pattern.permute.xlu0 0
    %311 = vperm.xlu0 %310, %v301
    %v312 = vpop.permute.xlu0 %311
    %315 = vset.pattern.permute.xlu0 0
    %316 = vperm.xlu0 %315, %v302
    %v317 = vpop.permute.xlu0 %316
    %320 = vset.pattern.permute.xlu0 0
    %321 = vperm.xlu0 %320, %v303
    %v322 = vpop.permute.xlu0 %321
    %v324 = vadd.f32 %v284, %v307
    %v325 = vadd.f32 %v285, %v307
    %v326 = vadd.f32 %v286, %v307
    %v327 = vadd.f32 %v287, %v307
    %v328 = vadd.f32 %v288, %v312
    %v329 = vadd.f32 %v289, %v312
    %v330 = vadd.f32 %v290, %v312
    %v331 = vadd.f32 %v291, %v312
    %v332 = vadd.f32 %v292, %v317
    %v333 = vadd.f32 %v293, %v317
    %v334 = vadd.f32 %v294, %v317
    %v335 = vadd.f32 %v295, %v317
    %v336 = vadd.f32 %v296, %v322
    %v337 = vadd.f32 %v297, %v322
    %v338 = vadd.f32 %v298, %v322
    %v339 = vadd.f32 %v299, %v322
    %340 = vrot.lane.b32.xlu0 %v243, 17
    %v341 = vpop.permute.xlu0 %340
    %342 = vrot.lane.b32.xlu0 %v247, 17
    %v343 = vpop.permute.xlu0 %342
    %344 = vrot.lane.b32.xlu0 %v251, 17
    %v345 = vpop.permute.xlu0 %344
    %346 = vrot.lane.b32.xlu0 %v255, 17
    %v347 = vpop.permute.xlu0 %346
    %348 = vrot.lane.b32.xlu0 %v244, 17
    %v349 = vpop.permute.xlu0 %348
    %350 = vrot.lane.b32.xlu0 %v248, 17
    %v351 = vpop.permute.xlu0 %350
    %352 = vrot.lane.b32.xlu0 %v252, 17
    %v353 = vpop.permute.xlu0 %352
    %354 = vrot.lane.b32.xlu0 %v256, 17
    %v355 = vpop.permute.xlu0 %354
    %356 = vrot.lane.b32.xlu0 %v245, 17
    %v357 = vpop.permute.xlu0 %356
    %358 = vrot.lane.b32.xlu0 %v249, 17
    %v359 = vpop.permute.xlu0 %358
    %360 = vrot.lane.b32.xlu0 %v253, 17
    %v361 = vpop.permute.xlu0 %360
    %362 = vrot.lane.b32.xlu0 %v257, 17
    %v363 = vpop.permute.xlu0 %362
    %364 = vrot.lane.b32.xlu0 %v246, 17
    %v365 = vpop.permute.xlu0 %364
    %366 = vrot.lane.b32.xlu0 %v250, 17
    %v367 = vpop.permute.xlu0 %366
    %368 = vrot.lane.b32.xlu0 %v254, 17
    %v369 = vpop.permute.xlu0 %368
    %370 = vrot.lane.b32.xlu0 %v258, 17
    %v371 = vpop.permute.xlu0 %370
    %v372 = vlaneseq
    %v373 = vand.u32 %v372, 127
    %vm374 = vcmp.lt.s32.totalorder %v373, 17
    %v375 = vsel %vm374, %v357, %v365
    %v376 = vsel %vm374, %v359, %v367
    %v377 = vsel %vm374, %v361, %v369
    %v378 = vsel %vm374, %v363, %v371
    %v379 = vsel %vm374, %v349, %v357
    %v380 = vsel %vm374, %v351, %v359
    %v381 = vsel %vm374, %v353, %v361
    %v382 = vsel %vm374, %v355, %v363
    %v383 = vsel %vm374, %v341, %v349
    %v384 = vsel %vm374, %v343, %v351
    %v385 = vsel %vm374, %v345, %v353
    %v386 = vsel %vm374, %v347, %v355
    %v387 = vsel %vm374, %v365, %v341
    %v388 = vsel %vm374, %v367, %v343
    %v389 = vsel %vm374, %v369, %v345
    %v390 = vsel %vm374, %v371, %v347
    %v391 = vld [vmem:[%s2] sm:$0xff]
    %v392 = vld [vmem:[%s2 + $0x8] sm:$0xff]
    %v393 = vld [vmem:[%s2 + $0x10] sm:$0xff]
    %v394 = vld [vmem:[%s2 + $0x18] sm:$0xff]
    %396 = vset.pattern.permute.xlu0 0
    %397 = vperm.xlu0 %396, %v391
    %v398 = vpop.permute.xlu0 %397
    %401 = vset.pattern.permute.xlu0 0
    %402 = vperm.xlu0 %401, %v392
    %v403 = vpop.permute.xlu0 %402
    %406 = vset.pattern.permute.xlu0 0
    %407 = vperm.xlu0 %406, %v393
    %v408 = vpop.permute.xlu0 %407
    %411 = vset.pattern.permute.xlu0 0
    %412 = vperm.xlu0 %411, %v394
    %v413 = vpop.permute.xlu0 %412
    %v415 = vmul.f32 %v387, %v398
    %v416 = vmul.f32 %v383, %v398
    %v417 = vmul.f32 %v379, %v398
    %v418 = vmul.f32 %v375, %v398
    %v419 = vmul.f32 %v388, %v403
    %v420 = vmul.f32 %v384, %v403
    %v421 = vmul.f32 %v380, %v403
    %v422 = vmul.f32 %v376, %v403
    %v423 = vmul.f32 %v389, %v408
    %v424 = vmul.f32 %v385, %v408
    %v425 = vmul.f32 %v381, %v408
    %v426 = vmul.f32 %v377, %v408
    %v427 = vmul.f32 %v390, %v413
    %v428 = vmul.f32 %v386, %v413
    %v429 = vmul.f32 %v382, %v413
    %v430 = vmul.f32 %v378, %v413
    %v431 = vld [vmem:[%s3] sm:$0xf]
    %v433 = vlaneseq
    %v434 = vshrl.u32 %v433, 7
    %v435 = vsub.s32 0, %v434
    %v436 = vrot.slane %v431, %v435
    %v437 = vlaneseq
    %v438 = vshrl.u32 %v437, 7
    %v439 = vsub.s32 1, %v438
    %v440 = vrot.slane %v431, %v439
    %v441 = vlaneseq
    %v442 = vshrl.u32 %v441, 7
    %v443 = vsub.s32 2, %v442
    %v444 = vrot.slane %v431, %v443
    %v445 = vlaneseq
    %v446 = vshrl.u32 %v445, 7
    %v447 = vsub.s32 3, %v446
    %v448 = vrot.slane %v431, %v447
    %v453 = vmul.f32 %v415, %v436
    %v454 = vmul.f32 %v416, %v440
    %v455 = vmul.f32 %v417, %v444
    %v456 = vmul.f32 %v418, %v448
    %v457 = vmul.f32 %v419, %v436
    %v458 = vmul.f32 %v420, %v440
    %v459 = vmul.f32 %v421, %v444
    %v460 = vmul.f32 %v422, %v448
    %v461 = vmul.f32 %v423, %v436
    %v462 = vmul.f32 %v424, %v440
    %v463 = vmul.f32 %v425, %v444
    %v464 = vmul.f32 %v426, %v448
    %v465 = vmul.f32 %v427, %v436
    %v466 = vmul.f32 %v428, %v440
    %v467 = vmul.f32 %v429, %v444
    %v468 = vmul.f32 %v430, %v448
    %v469 = vadd.f32 %v324, %v453
    %v470 = vadd.f32 %v325, %v454
    %v471 = vadd.f32 %v326, %v455
    %v472 = vadd.f32 %v327, %v456
    %v473 = vadd.f32 %v328, %v457
    %v474 = vadd.f32 %v329, %v458
    %v475 = vadd.f32 %v330, %v459
    %v476 = vadd.f32 %v331, %v460
    %v477 = vadd.f32 %v332, %v461
    %v478 = vadd.f32 %v333, %v462
    %v479 = vadd.f32 %v334, %v463
    %v480 = vadd.f32 %v335, %v464
    %v481 = vadd.f32 %v336, %v465
    %v482 = vadd.f32 %v337, %v466
    %v483 = vadd.f32 %v338, %v467
    %v484 = vadd.f32 %v339, %v468
    %485 = vrot.lane.b32.xlu0 %v243, 16
    %v486 = vpop.permute.xlu0 %485
    %487 = vrot.lane.b32.xlu0 %v247, 16
    %v488 = vpop.permute.xlu0 %487
    %489 = vrot.lane.b32.xlu0 %v251, 16
    %v490 = vpop.permute.xlu0 %489
    %491 = vrot.lane.b32.xlu0 %v255, 16
    %v492 = vpop.permute.xlu0 %491
    %493 = vrot.lane.b32.xlu0 %v244, 16
    %v494 = vpop.permute.xlu0 %493
    %495 = vrot.lane.b32.xlu0 %v248, 16
    %v496 = vpop.permute.xlu0 %495
    %497 = vrot.lane.b32.xlu0 %v252, 16
    %v498 = vpop.permute.xlu0 %497
    %499 = vrot.lane.b32.xlu0 %v256, 16
    %v500 = vpop.permute.xlu0 %499
    %501 = vrot.lane.b32.xlu0 %v245, 16
    %v502 = vpop.permute.xlu0 %501
    %503 = vrot.lane.b32.xlu0 %v249, 16
    %v504 = vpop.permute.xlu0 %503
    %505 = vrot.lane.b32.xlu0 %v253, 16
    %v506 = vpop.permute.xlu0 %505
    %507 = vrot.lane.b32.xlu0 %v257, 16
    %v508 = vpop.permute.xlu0 %507
    %509 = vrot.lane.b32.xlu0 %v246, 16
    %v510 = vpop.permute.xlu0 %509
    %511 = vrot.lane.b32.xlu0 %v250, 16
    %v512 = vpop.permute.xlu0 %511
    %513 = vrot.lane.b32.xlu0 %v254, 16
    %v514 = vpop.permute.xlu0 %513
    %515 = vrot.lane.b32.xlu0 %v258, 16
    %v516 = vpop.permute.xlu0 %515
    %vm517 = vcmp.lt.s32.totalorder %v373, 16
    %v518 = vsel %vm517, %v502, %v510
    %v519 = vsel %vm517, %v504, %v512
    %v520 = vsel %vm517, %v506, %v514
    %v521 = vsel %vm517, %v508, %v516
    %v522 = vsel %vm517, %v494, %v502
    %v523 = vsel %vm517, %v496, %v504
    %v524 = vsel %vm517, %v498, %v506
    %v525 = vsel %vm517, %v500, %v508
    %v526 = vsel %vm517, %v486, %v494
    %v527 = vsel %vm517, %v488, %v496
    %v528 = vsel %vm517, %v490, %v498
    %v529 = vsel %vm517, %v492, %v500
    %v530 = vsel %vm517, %v510, %v486
    %v531 = vsel %vm517, %v512, %v488
    %v532 = vsel %vm517, %v514, %v490
    %v533 = vsel %vm517, %v516, %v492
    %s534 = scalar_lea.vmem %s2, 32
    %v535 = vld [vmem:[%s534] sm:$0xff]
    %v536 = vld [vmem:[%s534 + $0x8] sm:$0xff]
    %v537 = vld [vmem:[%s534 + $0x10] sm:$0xff]
    %v538 = vld [vmem:[%s534 + $0x18] sm:$0xff]
    %540 = vset.pattern.permute.xlu0 0
    %541 = vperm.xlu0 %540, %v535
    %v542 = vpop.permute.xlu0 %541
    %545 = vset.pattern.permute.xlu0 0
    %546 = vperm.xlu0 %545, %v536
    %v547 = vpop.permute.xlu0 %546
    %550 = vset.pattern.permute.xlu0 0
    %551 = vperm.xlu0 %550, %v537
    %v552 = vpop.permute.xlu0 %551
    %555 = vset.pattern.permute.xlu0 0
    %556 = vperm.xlu0 %555, %v538
    %v557 = vpop.permute.xlu0 %556
    %v559 = vmul.f32 %v530, %v542
    %v560 = vmul.f32 %v526, %v542
    %v561 = vmul.f32 %v522, %v542
    %v562 = vmul.f32 %v518, %v542
    %v563 = vmul.f32 %v531, %v547
    %v564 = vmul.f32 %v527, %v547
    %v565 = vmul.f32 %v523, %v547
    %v566 = vmul.f32 %v519, %v547
    %v567 = vmul.f32 %v532, %v552
    %v568 = vmul.f32 %v528, %v552
    %v569 = vmul.f32 %v524, %v552
    %v570 = vmul.f32 %v520, %v552
    %v571 = vmul.f32 %v533, %v557
    %v572 = vmul.f32 %v529, %v557
    %v573 = vmul.f32 %v525, %v557
    %v574 = vmul.f32 %v521, %v557
    %s575 = scalar_lea.vmem %s3, 4
    %v576 = vld [vmem:[%s575] sm:$0xf]
    %v578 = vlaneseq
    %v579 = vshrl.u32 %v578, 7
    %v580 = vsub.s32 0, %v579
    %v581 = vrot.slane %v576, %v580
    %v582 = vlaneseq
    %v583 = vshrl.u32 %v582, 7
    %v584 = vsub.s32 1, %v583
    %v585 = vrot.slane %v576, %v584
    %v586 = vlaneseq
    %v587 = vshrl.u32 %v586, 7
    %v588 = vsub.s32 2, %v587
    %v589 = vrot.slane %v576, %v588
    %v590 = vlaneseq
    %v591 = vshrl.u32 %v590, 7
    %v592 = vsub.s32 3, %v591
    %v593 = vrot.slane %v576, %v592
    %v598 = vmul.f32 %v559, %v581
    %v599 = vmul.f32 %v560, %v585
    %v600 = vmul.f32 %v561, %v589
    %v601 = vmul.f32 %v562, %v593
    %v602 = vmul.f32 %v563, %v581
    %v603 = vmul.f32 %v564, %v585
    %v604 = vmul.f32 %v565, %v589
    %v605 = vmul.f32 %v566, %v593
    %v606 = vmul.f32 %v567, %v581
    %v607 = vmul.f32 %v568, %v585
    %v608 = vmul.f32 %v569, %v589
    %v609 = vmul.f32 %v570, %v593
    %v610 = vmul.f32 %v571, %v581
    %v611 = vmul.f32 %v572, %v585
    %v612 = vmul.f32 %v573, %v589
    %v613 = vmul.f32 %v574, %v593
    %v614 = vadd.f32 %v469, %v598
    %v615 = vadd.f32 %v470, %v599
    %v616 = vadd.f32 %v471, %v600
    %v617 = vadd.f32 %v472, %v601
    %v618 = vadd.f32 %v473, %v602
    %v619 = vadd.f32 %v474, %v603
    %v620 = vadd.f32 %v475, %v604
    %v621 = vadd.f32 %v476, %v605
    %v622 = vadd.f32 %v477, %v606
    %v623 = vadd.f32 %v478, %v607
    %v624 = vadd.f32 %v479, %v608
    %v625 = vadd.f32 %v480, %v609
    %v626 = vadd.f32 %v481, %v610
    %v627 = vadd.f32 %v482, %v611
    %v628 = vadd.f32 %v483, %v612
    %v629 = vadd.f32 %v484, %v613
    %630 = vrot.lane.b32.xlu0 %v243, 15
    %v631 = vpop.permute.xlu0 %630
    %632 = vrot.lane.b32.xlu0 %v247, 15
    %v633 = vpop.permute.xlu0 %632
    %634 = vrot.lane.b32.xlu0 %v251, 15
    %v635 = vpop.permute.xlu0 %634
    %636 = vrot.lane.b32.xlu0 %v255, 15
    %v637 = vpop.permute.xlu0 %636
    %638 = vrot.lane.b32.xlu0 %v244, 15
    %v639 = vpop.permute.xlu0 %638
    %640 = vrot.lane.b32.xlu0 %v248, 15
    %v641 = vpop.permute.xlu0 %640
    %642 = vrot.lane.b32.xlu0 %v252, 15
    %v643 = vpop.permute.xlu0 %642
    %644 = vrot.lane.b32.xlu0 %v256, 15
    %v645 = vpop.permute.xlu0 %644
    %646 = vrot.lane.b32.xlu0 %v245, 15
    %v647 = vpop.permute.xlu0 %646
    %648 = vrot.lane.b32.xlu0 %v249, 15
    %v649 = vpop.permute.xlu0 %648
    %650 = vrot.lane.b32.xlu0 %v253, 15
    %v651 = vpop.permute.xlu0 %650
    %652 = vrot.lane.b32.xlu0 %v257, 15
    %v653 = vpop.permute.xlu0 %652
    %654 = vrot.lane.b32.xlu0 %v246, 15
    %v655 = vpop.permute.xlu0 %654
    %656 = vrot.lane.b32.xlu0 %v250, 15
    %v657 = vpop.permute.xlu0 %656
    %658 = vrot.lane.b32.xlu0 %v254, 15
    %v659 = vpop.permute.xlu0 %658
    %660 = vrot.lane.b32.xlu0 %v258, 15
    %v661 = vpop.permute.xlu0 %660
    %vm662 = vcmp.lt.s32.totalorder %v373, 15
    %v663 = vsel %vm662, %v647, %v655
    %v664 = vsel %vm662, %v649, %v657
    %v665 = vsel %vm662, %v651, %v659
    %v666 = vsel %vm662, %v653, %v661
    %v667 = vsel %vm662, %v639, %v647
    %v668 = vsel %vm662, %v641, %v649
    %v669 = vsel %vm662, %v643, %v651
    %v670 = vsel %vm662, %v645, %v653
    %v671 = vsel %vm662, %v631, %v639
    %v672 = vsel %vm662, %v633, %v641
    %v673 = vsel %vm662, %v635, %v643
    %v674 = vsel %vm662, %v637, %v645
    %v675 = vsel %vm662, %v655, %v631
    %v676 = vsel %vm662, %v657, %v633
    %v677 = vsel %vm662, %v659, %v635
    %v678 = vsel %vm662, %v661, %v637
    %s679 = scalar_lea.vmem %s2, 64
    %v680 = vld [vmem:[%s679] sm:$0xff]
    %v681 = vld [vmem:[%s679 + $0x8] sm:$0xff]
    %v682 = vld [vmem:[%s679 + $0x10] sm:$0xff]
    %v683 = vld [vmem:[%s679 + $0x18] sm:$0xff]
    %685 = vset.pattern.permute.xlu0 0
    %686 = vperm.xlu0 %685, %v680
    %v687 = vpop.permute.xlu0 %686
    %690 = vset.pattern.permute.xlu0 0
    %691 = vperm.xlu0 %690, %v681
    %v692 = vpop.permute.xlu0 %691
    %695 = vset.pattern.permute.xlu0 0
    %696 = vperm.xlu0 %695, %v682
    %v697 = vpop.permute.xlu0 %696
    %700 = vset.pattern.permute.xlu0 0
    %701 = vperm.xlu0 %700, %v683
    %v702 = vpop.permute.xlu0 %701
    %v704 = vmul.f32 %v675, %v687
    %v705 = vmul.f32 %v671, %v687
    %v706 = vmul.f32 %v667, %v687
    %v707 = vmul.f32 %v663, %v687
    %v708 = vmul.f32 %v676, %v692
    %v709 = vmul.f32 %v672, %v692
    %v710 = vmul.f32 %v668, %v692
    %v711 = vmul.f32 %v664, %v692
    %v712 = vmul.f32 %v677, %v697
    %v713 = vmul.f32 %v673, %v697
    %v714 = vmul.f32 %v669, %v697
    %v715 = vmul.f32 %v665, %v697
    %v716 = vmul.f32 %v678, %v702
    %v717 = vmul.f32 %v674, %v702
    %v718 = vmul.f32 %v670, %v702
    %v719 = vmul.f32 %v666, %v702
    %s720 = scalar_lea.vmem %s3, 8
    %v721 = vld [vmem:[%s720] sm:$0xf]
    %v723 = vlaneseq
    %v724 = vshrl.u32 %v723, 7
    %v725 = vsub.s32 0, %v724
    %v726 = vrot.slane %v721, %v725
    %v727 = vlaneseq
    %v728 = vshrl.u32 %v727, 7
    %v729 = vsub.s32 1, %v728
    %v730 = vrot.slane %v721, %v729
    %v731 = vlaneseq
    %v732 = vshrl.u32 %v731, 7
    %v733 = vsub.s32 2, %v732
    %v734 = vrot.slane %v721, %v733
    %v735 = vlaneseq
    %v736 = vshrl.u32 %v735, 7
    %v737 = vsub.s32 3, %v736
    %v738 = vrot.slane %v721, %v737
    %v743 = vmul.f32 %v704, %v726
    %v744 = vmul.f32 %v705, %v730
    %v745 = vmul.f32 %v706, %v734
    %v746 = vmul.f32 %v707, %v738
    %v747 = vmul.f32 %v708, %v726
    %v748 = vmul.f32 %v709, %v730
    %v749 = vmul.f32 %v710, %v734
    %v750 = vmul.f32 %v711, %v738
    %v751 = vmul.f32 %v712, %v726
    %v752 = vmul.f32 %v713, %v730
    %v753 = vmul.f32 %v714, %v734
    %v754 = vmul.f32 %v715, %v738
    %v755 = vmul.f32 %v716, %v726
    %v756 = vmul.f32 %v717, %v730
    %v757 = vmul.f32 %v718, %v734
    %v758 = vmul.f32 %v719, %v738
    %v759 = vadd.f32 %v614, %v743
    %v760 = vadd.f32 %v615, %v744
    %v761 = vadd.f32 %v616, %v745
    %v762 = vadd.f32 %v617, %v746
    %v763 = vadd.f32 %v618, %v747
    %v764 = vadd.f32 %v619, %v748
    %v765 = vadd.f32 %v620, %v749
    %v766 = vadd.f32 %v621, %v750
    %v767 = vadd.f32 %v622, %v751
    %v768 = vadd.f32 %v623, %v752
    %v769 = vadd.f32 %v624, %v753
    %v770 = vadd.f32 %v625, %v754
    %v771 = vadd.f32 %v626, %v755
    %v772 = vadd.f32 %v627, %v756
    %v773 = vadd.f32 %v628, %v757
    %v774 = vadd.f32 %v629, %v758
    %775 = vrot.lane.b32.xlu0 %v243, 1
    %v776 = vpop.permute.xlu0 %775
    %777 = vrot.lane.b32.xlu0 %v247, 1
    %v778 = vpop.permute.xlu0 %777
    %779 = vrot.lane.b32.xlu0 %v251, 1
    %v780 = vpop.permute.xlu0 %779
    %781 = vrot.lane.b32.xlu0 %v255, 1
    %v782 = vpop.permute.xlu0 %781
    %783 = vrot.lane.b32.xlu0 %v244, 1
    %v784 = vpop.permute.xlu0 %783
    %785 = vrot.lane.b32.xlu0 %v248, 1
    %v786 = vpop.permute.xlu0 %785
    %787 = vrot.lane.b32.xlu0 %v252, 1
    %v788 = vpop.permute.xlu0 %787
    %789 = vrot.lane.b32.xlu0 %v256, 1
    %v790 = vpop.permute.xlu0 %789
    %791 = vrot.lane.b32.xlu0 %v245, 1
    %v792 = vpop.permute.xlu0 %791
    %793 = vrot.lane.b32.xlu0 %v249, 1
    %v794 = vpop.permute.xlu0 %793
    %795 = vrot.lane.b32.xlu0 %v253, 1
    %v796 = vpop.permute.xlu0 %795
    %797 = vrot.lane.b32.xlu0 %v257, 1
    %v798 = vpop.permute.xlu0 %797
    %799 = vrot.lane.b32.xlu0 %v246, 1
    %v800 = vpop.permute.xlu0 %799
    %801 = vrot.lane.b32.xlu0 %v250, 1
    %v802 = vpop.permute.xlu0 %801
    %803 = vrot.lane.b32.xlu0 %v254, 1
    %v804 = vpop.permute.xlu0 %803
    %805 = vrot.lane.b32.xlu0 %v258, 1
    %v806 = vpop.permute.xlu0 %805
    %vm807 = vcmp.lt.s32.totalorder %v373, 1
    %v808 = vsel %vm807, %v792, %v800
    %v809 = vsel %vm807, %v794, %v802
    %v810 = vsel %vm807, %v796, %v804
    %v811 = vsel %vm807, %v798, %v806
    %v812 = vsel %vm807, %v784, %v792
    %v813 = vsel %vm807, %v786, %v794
    %v814 = vsel %vm807, %v788, %v796
    %v815 = vsel %vm807, %v790, %v798
    %v816 = vsel %vm807, %v776, %v784
    %v817 = vsel %vm807, %v778, %v786
    %v818 = vsel %vm807, %v780, %v788
    %v819 = vsel %vm807, %v782, %v790
    %v820 = vsel %vm807, %v800, %v776
    %v821 = vsel %vm807, %v802, %v778
    %v822 = vsel %vm807, %v804, %v780
    %v823 = vsel %vm807, %v806, %v782
    %s824 = scalar_lea.vmem %s2, 96
    %v825 = vld [vmem:[%s824] sm:$0xff]
    %v826 = vld [vmem:[%s824 + $0x8] sm:$0xff]
    %v827 = vld [vmem:[%s824 + $0x10] sm:$0xff]
    %v828 = vld [vmem:[%s824 + $0x18] sm:$0xff]
    %830 = vset.pattern.permute.xlu0 0
    %831 = vperm.xlu0 %830, %v825
    %v832 = vpop.permute.xlu0 %831
    %835 = vset.pattern.permute.xlu0 0
    %836 = vperm.xlu0 %835, %v826
    %v837 = vpop.permute.xlu0 %836
    %840 = vset.pattern.permute.xlu0 0
    %841 = vperm.xlu0 %840, %v827
    %v842 = vpop.permute.xlu0 %841
    %845 = vset.pattern.permute.xlu0 0
    %846 = vperm.xlu0 %845, %v828
    %v847 = vpop.permute.xlu0 %846
    %v849 = vmul.f32 %v820, %v832
    %v850 = vmul.f32 %v816, %v832
    %v851 = vmul.f32 %v812, %v832
    %v852 = vmul.f32 %v808, %v832
    %v853 = vmul.f32 %v821, %v837
    %v854 = vmul.f32 %v817, %v837
    %v855 = vmul.f32 %v813, %v837
    %v856 = vmul.f32 %v809, %v837
    %v857 = vmul.f32 %v822, %v842
    %v858 = vmul.f32 %v818, %v842
    %v859 = vmul.f32 %v814, %v842
    %v860 = vmul.f32 %v810, %v842
    %v861 = vmul.f32 %v823, %v847
    %v862 = vmul.f32 %v819, %v847
    %v863 = vmul.f32 %v815, %v847
    %v864 = vmul.f32 %v811, %v847
    %s865 = scalar_lea.vmem %s3, 12
    %v866 = vld [vmem:[%s865] sm:$0xf]
    %v868 = vlaneseq
    %v869 = vshrl.u32 %v868, 7
    %v870 = vsub.s32 0, %v869
    %v871 = vrot.slane %v866, %v870
    %v872 = vlaneseq
    %v873 = vshrl.u32 %v872, 7
    %v874 = vsub.s32 1, %v873
    %v875 = vrot.slane %v866, %v874
    %v876 = vlaneseq
    %v877 = vshrl.u32 %v876, 7
    %v878 = vsub.s32 2, %v877
    %v879 = vrot.slane %v866, %v878
    %v880 = vlaneseq
    %v881 = vshrl.u32 %v880, 7
    %v882 = vsub.s32 3, %v881
    %v883 = vrot.slane %v866, %v882
    %v888 = vmul.f32 %v849, %v871
    %v889 = vmul.f32 %v850, %v875
    %v890 = vmul.f32 %v851, %v879
    %v891 = vmul.f32 %v852, %v883
    %v892 = vmul.f32 %v853, %v871
    %v893 = vmul.f32 %v854, %v875
    %v894 = vmul.f32 %v855, %v879
    %v895 = vmul.f32 %v856, %v883
    %v896 = vmul.f32 %v857, %v871
    %v897 = vmul.f32 %v858, %v875
    %v898 = vmul.f32 %v859, %v879
    %v899 = vmul.f32 %v860, %v883
    %v900 = vmul.f32 %v861, %v871
    %v901 = vmul.f32 %v862, %v875
    %v902 = vmul.f32 %v863, %v879
    %v903 = vmul.f32 %v864, %v883
    %v904 = vadd.f32 %v759, %v888
    %v905 = vadd.f32 %v760, %v889
    %v906 = vadd.f32 %v761, %v890
    %v907 = vadd.f32 %v762, %v891
    %v908 = vadd.f32 %v763, %v892
    %v909 = vadd.f32 %v764, %v893
    %v910 = vadd.f32 %v765, %v894
    %v911 = vadd.f32 %v766, %v895
    %v912 = vadd.f32 %v767, %v896
    %v913 = vadd.f32 %v768, %v897
    %v914 = vadd.f32 %v769, %v898
    %v915 = vadd.f32 %v770, %v899
    %v916 = vadd.f32 %v771, %v900
    %v917 = vadd.f32 %v772, %v901
    %v918 = vadd.f32 %v773, %v902
    %v919 = vadd.f32 %v774, %v903
    %920 = vrot.lane.b32.xlu0 %v243, 127
    %v921 = vpop.permute.xlu0 %920
    %922 = vrot.lane.b32.xlu0 %v247, 127
    %v923 = vpop.permute.xlu0 %922
    %924 = vrot.lane.b32.xlu0 %v251, 127
    %v925 = vpop.permute.xlu0 %924
    %926 = vrot.lane.b32.xlu0 %v255, 127
    %v927 = vpop.permute.xlu0 %926
    %928 = vrot.lane.b32.xlu0 %v244, 127
    %v929 = vpop.permute.xlu0 %928
    %930 = vrot.lane.b32.xlu0 %v248, 127
    %v931 = vpop.permute.xlu0 %930
    %932 = vrot.lane.b32.xlu0 %v252, 127
    %v933 = vpop.permute.xlu0 %932
    %934 = vrot.lane.b32.xlu0 %v256, 127
    %v935 = vpop.permute.xlu0 %934
    %936 = vrot.lane.b32.xlu0 %v245, 127
    %v937 = vpop.permute.xlu0 %936
    %938 = vrot.lane.b32.xlu0 %v249, 127
    %v939 = vpop.permute.xlu0 %938
    %940 = vrot.lane.b32.xlu0 %v253, 127
    %v941 = vpop.permute.xlu0 %940
    %942 = vrot.lane.b32.xlu0 %v257, 127
    %v943 = vpop.permute.xlu0 %942
    %944 = vrot.lane.b32.xlu0 %v246, 127
    %v945 = vpop.permute.xlu0 %944
    %946 = vrot.lane.b32.xlu0 %v250, 127
    %v947 = vpop.permute.xlu0 %946
    %948 = vrot.lane.b32.xlu0 %v254, 127
    %v949 = vpop.permute.xlu0 %948
    %950 = vrot.lane.b32.xlu0 %v258, 127
    %v951 = vpop.permute.xlu0 %950
    %vm952 = vcmp.lt.s32.totalorder %v373, 127
    %v953 = vsel %vm952, %v937, %v945
    %v954 = vsel %vm952, %v939, %v947
    %v955 = vsel %vm952, %v941, %v949
    %v956 = vsel %vm952, %v943, %v951
    %v957 = vsel %vm952, %v929, %v937
    %v958 = vsel %vm952, %v931, %v939
    %v959 = vsel %vm952, %v933, %v941
    %v960 = vsel %vm952, %v935, %v943
    %v961 = vsel %vm952, %v921, %v929
    %v962 = vsel %vm952, %v923, %v931
    %v963 = vsel %vm952, %v925, %v933
    %v964 = vsel %vm952, %v927, %v935
    %v965 = vsel %vm952, %v945, %v921
    %v966 = vsel %vm952, %v947, %v923
    %v967 = vsel %vm952, %v949, %v925
    %v968 = vsel %vm952, %v951, %v927
    %s969 = scalar_lea.vmem %s2, 160
    %v970 = vld [vmem:[%s969] sm:$0xff]
    %v971 = vld [vmem:[%s969 + $0x8] sm:$0xff]
    %v972 = vld [vmem:[%s969 + $0x10] sm:$0xff]
    %v973 = vld [vmem:[%s969 + $0x18] sm:$0xff]
    %975 = vset.pattern.permute.xlu0 0
    %976 = vperm.xlu0 %975, %v970
    %v977 = vpop.permute.xlu0 %976
    %980 = vset.pattern.permute.xlu0 0
    %981 = vperm.xlu0 %980, %v971
    %v982 = vpop.permute.xlu0 %981
    %985 = vset.pattern.permute.xlu0 0
    %986 = vperm.xlu0 %985, %v972
    %v987 = vpop.permute.xlu0 %986
    %990 = vset.pattern.permute.xlu0 0
    %991 = vperm.xlu0 %990, %v973
    %v992 = vpop.permute.xlu0 %991
    %v994 = vmul.f32 %v961, %v977
    %v995 = vmul.f32 %v957, %v977
    %v996 = vmul.f32 %v953, %v977
    %v997 = vmul.f32 %v965, %v977
    %v998 = vmul.f32 %v962, %v982
    %v999 = vmul.f32 %v958, %v982
    %v1000 = vmul.f32 %v954, %v982
    %v1001 = vmul.f32 %v966, %v982
    %v1002 = vmul.f32 %v963, %v987
    %v1003 = vmul.f32 %v959, %v987
    %v1004 = vmul.f32 %v955, %v987
    %v1005 = vmul.f32 %v967, %v987
    %v1006 = vmul.f32 %v964, %v992
    %v1007 = vmul.f32 %v960, %v992
    %v1008 = vmul.f32 %v956, %v992
    %v1009 = vmul.f32 %v968, %v992
    %s1010 = scalar_lea.vmem %s3, 20
    %v1011 = vld [vmem:[%s1010] sm:$0xf]
    %v1013 = vlaneseq
    %v1014 = vshrl.u32 %v1013, 7
    %v1015 = vsub.s32 0, %v1014
    %v1016 = vrot.slane %v1011, %v1015
    %v1017 = vlaneseq
    %v1018 = vshrl.u32 %v1017, 7
    %v1019 = vsub.s32 1, %v1018
    %v1020 = vrot.slane %v1011, %v1019
    %v1021 = vlaneseq
    %v1022 = vshrl.u32 %v1021, 7
    %v1023 = vsub.s32 2, %v1022
    %v1024 = vrot.slane %v1011, %v1023
    %v1025 = vlaneseq
    %v1026 = vshrl.u32 %v1025, 7
    %v1027 = vsub.s32 3, %v1026
    %v1028 = vrot.slane %v1011, %v1027
    %v1033 = vmul.f32 %v994, %v1016
    %v1034 = vmul.f32 %v995, %v1020
    %v1035 = vmul.f32 %v996, %v1024
    %v1036 = vmul.f32 %v997, %v1028
    %v1037 = vmul.f32 %v998, %v1016
    %v1038 = vmul.f32 %v999, %v1020
    %v1039 = vmul.f32 %v1000, %v1024
    %v1040 = vmul.f32 %v1001, %v1028
    %v1041 = vmul.f32 %v1002, %v1016
    %v1042 = vmul.f32 %v1003, %v1020
    %v1043 = vmul.f32 %v1004, %v1024
    %v1044 = vmul.f32 %v1005, %v1028
    %v1045 = vmul.f32 %v1006, %v1016
    %v1046 = vmul.f32 %v1007, %v1020
    %v1047 = vmul.f32 %v1008, %v1024
    %v1048 = vmul.f32 %v1009, %v1028
    %v1049 = vadd.f32 %v904, %v1033
    %v1050 = vadd.f32 %v905, %v1034
    %v1051 = vadd.f32 %v906, %v1035
    %v1052 = vadd.f32 %v907, %v1036
    %v1053 = vadd.f32 %v908, %v1037
    %v1054 = vadd.f32 %v909, %v1038
    %v1055 = vadd.f32 %v910, %v1039
    %v1056 = vadd.f32 %v911, %v1040
    %v1057 = vadd.f32 %v912, %v1041
    %v1058 = vadd.f32 %v913, %v1042
    %v1059 = vadd.f32 %v914, %v1043
    %v1060 = vadd.f32 %v915, %v1044
    %v1061 = vadd.f32 %v916, %v1045
    %v1062 = vadd.f32 %v917, %v1046
    %v1063 = vadd.f32 %v918, %v1047
    %v1064 = vadd.f32 %v919, %v1048
    %1065 = vrot.lane.b32.xlu0 %v243, 113
    %v1066 = vpop.permute.xlu0 %1065
    %1067 = vrot.lane.b32.xlu0 %v247, 113
    %v1068 = vpop.permute.xlu0 %1067
    %1069 = vrot.lane.b32.xlu0 %v251, 113
    %v1070 = vpop.permute.xlu0 %1069
    %1071 = vrot.lane.b32.xlu0 %v255, 113
    %v1072 = vpop.permute.xlu0 %1071
    %1073 = vrot.lane.b32.xlu0 %v244, 113
    %v1074 = vpop.permute.xlu0 %1073
    %1075 = vrot.lane.b32.xlu0 %v248, 113
    %v1076 = vpop.permute.xlu0 %1075
    %1077 = vrot.lane.b32.xlu0 %v252, 113
    %v1078 = vpop.permute.xlu0 %1077
    %1079 = vrot.lane.b32.xlu0 %v256, 113
    %v1080 = vpop.permute.xlu0 %1079
    %1081 = vrot.lane.b32.xlu0 %v245, 113
    %v1082 = vpop.permute.xlu0 %1081
    %1083 = vrot.lane.b32.xlu0 %v249, 113
    %v1084 = vpop.permute.xlu0 %1083
    %1085 = vrot.lane.b32.xlu0 %v253, 113
    %v1086 = vpop.permute.xlu0 %1085
    %1087 = vrot.lane.b32.xlu0 %v257, 113
    %v1088 = vpop.permute.xlu0 %1087
    %1089 = vrot.lane.b32.xlu0 %v246, 113
    %v1090 = vpop.permute.xlu0 %1089
    %1091 = vrot.lane.b32.xlu0 %v250, 113
    %v1092 = vpop.permute.xlu0 %1091
    %1093 = vrot.lane.b32.xlu0 %v254, 113
    %v1094 = vpop.permute.xlu0 %1093
    %1095 = vrot.lane.b32.xlu0 %v258, 113
    %v1096 = vpop.permute.xlu0 %1095
    %vm1097 = vcmp.lt.s32.totalorder %v373, 113
    %v1098 = vsel %vm1097, %v1082, %v1090
    %v1099 = vsel %vm1097, %v1084, %v1092
    %v1100 = vsel %vm1097, %v1086, %v1094
    %v1101 = vsel %vm1097, %v1088, %v1096
    %v1102 = vsel %vm1097, %v1074, %v1082
    %v1103 = vsel %vm1097, %v1076, %v1084
    %v1104 = vsel %vm1097, %v1078, %v1086
    %v1105 = vsel %vm1097, %v1080, %v1088
    %v1106 = vsel %vm1097, %v1066, %v1074
    %v1107 = vsel %vm1097, %v1068, %v1076
    %v1108 = vsel %vm1097, %v1070, %v1078
    %v1109 = vsel %vm1097, %v1072, %v1080
    %v1110 = vsel %vm1097, %v1090, %v1066
    %v1111 = vsel %vm1097, %v1092, %v1068
    %v1112 = vsel %vm1097, %v1094, %v1070
    %v1113 = vsel %vm1097, %v1096, %v1072
    %s1114 = scalar_lea.vmem %s2, 192
    %v1115 = vld [vmem:[%s1114] sm:$0xff]
    %v1116 = vld [vmem:[%s1114 + $0x8] sm:$0xff]
    %v1117 = vld [vmem:[%s1114 + $0x10] sm:$0xff]
    %v1118 = vld [vmem:[%s1114 + $0x18] sm:$0xff]
    %1120 = vset.pattern.permute.xlu0 0
    %1121 = vperm.xlu0 %1120, %v1115
    %v1122 = vpop.permute.xlu0 %1121
    %1125 = vset.pattern.permute.xlu0 0
    %1126 = vperm.xlu0 %1125, %v1116
    %v1127 = vpop.permute.xlu0 %1126
    %1130 = vset.pattern.permute.xlu0 0
    %1131 = vperm.xlu0 %1130, %v1117
    %v1132 = vpop.permute.xlu0 %1131
    %1135 = vset.pattern.permute.xlu0 0
    %1136 = vperm.xlu0 %1135, %v1118
    %v1137 = vpop.permute.xlu0 %1136
    %v1139 = vmul.f32 %v1106, %v1122
    %v1140 = vmul.f32 %v1102, %v1122
    %v1141 = vmul.f32 %v1098, %v1122
    %v1142 = vmul.f32 %v1110, %v1122
    %v1143 = vmul.f32 %v1107, %v1127
    %v1144 = vmul.f32 %v1103, %v1127
    %v1145 = vmul.f32 %v1099, %v1127
    %v1146 = vmul.f32 %v1111, %v1127
    %v1147 = vmul.f32 %v1108, %v1132
    %v1148 = vmul.f32 %v1104, %v1132
    %v1149 = vmul.f32 %v1100, %v1132
    %v1150 = vmul.f32 %v1112, %v1132
    %v1151 = vmul.f32 %v1109, %v1137
    %v1152 = vmul.f32 %v1105, %v1137
    %v1153 = vmul.f32 %v1101, %v1137
    %v1154 = vmul.f32 %v1113, %v1137
    %s1155 = scalar_lea.vmem %s3, 24
    %v1156 = vld [vmem:[%s1155] sm:$0xf]
    %v1158 = vlaneseq
    %v1159 = vshrl.u32 %v1158, 7
    %v1160 = vsub.s32 0, %v1159
    %v1161 = vrot.slane %v1156, %v1160
    %v1162 = vlaneseq
    %v1163 = vshrl.u32 %v1162, 7
    %v1164 = vsub.s32 1, %v1163
    %v1165 = vrot.slane %v1156, %v1164
    %v1166 = vlaneseq
    %v1167 = vshrl.u32 %v1166, 7
    %v1168 = vsub.s32 2, %v1167
    %v1169 = vrot.slane %v1156, %v1168
    %v1170 = vlaneseq
    %v1171 = vshrl.u32 %v1170, 7
    %v1172 = vsub.s32 3, %v1171
    %v1173 = vrot.slane %v1156, %v1172
    %v1178 = vmul.f32 %v1139, %v1161
    %v1179 = vmul.f32 %v1140, %v1165
    %v1180 = vmul.f32 %v1141, %v1169
    %v1181 = vmul.f32 %v1142, %v1173
    %v1182 = vmul.f32 %v1143, %v1161
    %v1183 = vmul.f32 %v1144, %v1165
    %v1184 = vmul.f32 %v1145, %v1169
    %v1185 = vmul.f32 %v1146, %v1173
    %v1186 = vmul.f32 %v1147, %v1161
    %v1187 = vmul.f32 %v1148, %v1165
    %v1188 = vmul.f32 %v1149, %v1169
    %v1189 = vmul.f32 %v1150, %v1173
    %v1190 = vmul.f32 %v1151, %v1161
    %v1191 = vmul.f32 %v1152, %v1165
    %v1192 = vmul.f32 %v1153, %v1169
    %v1193 = vmul.f32 %v1154, %v1173
    %v1194 = vadd.f32 %v1049, %v1178
    %v1195 = vadd.f32 %v1050, %v1179
    %v1196 = vadd.f32 %v1051, %v1180
    %v1197 = vadd.f32 %v1052, %v1181
    %v1198 = vadd.f32 %v1053, %v1182
    %v1199 = vadd.f32 %v1054, %v1183
    %v1200 = vadd.f32 %v1055, %v1184
    %v1201 = vadd.f32 %v1056, %v1185
    %v1202 = vadd.f32 %v1057, %v1186
    %v1203 = vadd.f32 %v1058, %v1187
    %v1204 = vadd.f32 %v1059, %v1188
    %v1205 = vadd.f32 %v1060, %v1189
    %v1206 = vadd.f32 %v1061, %v1190
    %v1207 = vadd.f32 %v1062, %v1191
    %v1208 = vadd.f32 %v1063, %v1192
    %v1209 = vadd.f32 %v1064, %v1193
    %1210 = vrot.lane.b32.xlu0 %v243, 112
    %v1211 = vpop.permute.xlu0 %1210
    %1212 = vrot.lane.b32.xlu0 %v247, 112
    %v1213 = vpop.permute.xlu0 %1212
    %1214 = vrot.lane.b32.xlu0 %v251, 112
    %v1215 = vpop.permute.xlu0 %1214
    %1216 = vrot.lane.b32.xlu0 %v255, 112
    %v1217 = vpop.permute.xlu0 %1216
    %1218 = vrot.lane.b32.xlu0 %v244, 112
    %v1219 = vpop.permute.xlu0 %1218
    %1220 = vrot.lane.b32.xlu0 %v248, 112
    %v1221 = vpop.permute.xlu0 %1220
    %1222 = vrot.lane.b32.xlu0 %v252, 112
    %v1223 = vpop.permute.xlu0 %1222
    %1224 = vrot.lane.b32.xlu0 %v256, 112
    %v1225 = vpop.permute.xlu0 %1224
    %1226 = vrot.lane.b32.xlu0 %v245, 112
    %v1227 = vpop.permute.xlu0 %1226
    %1228 = vrot.lane.b32.xlu0 %v249, 112
    %v1229 = vpop.permute.xlu0 %1228
    %1230 = vrot.lane.b32.xlu0 %v253, 112
    %v1231 = vpop.permute.xlu0 %1230
    %1232 = vrot.lane.b32.xlu0 %v257, 112
    %v1233 = vpop.permute.xlu0 %1232
    %1234 = vrot.lane.b32.xlu0 %v246, 112
    %v1235 = vpop.permute.xlu0 %1234
    %1236 = vrot.lane.b32.xlu0 %v250, 112
    %v1237 = vpop.permute.xlu0 %1236
    %1238 = vrot.lane.b32.xlu0 %v254, 112
    %v1239 = vpop.permute.xlu0 %1238
    %1240 = vrot.lane.b32.xlu0 %v258, 112
    %v1241 = vpop.permute.xlu0 %1240
    %vm1242 = vcmp.lt.s32.totalorder %v373, 112
    %v1243 = vsel %vm1242, %v1227, %v1235
    %v1244 = vsel %vm1242, %v1229, %v1237
    %v1245 = vsel %vm1242, %v1231, %v1239
    %v1246 = vsel %vm1242, %v1233, %v1241
    %v1247 = vsel %vm1242, %v1219, %v1227
    %v1248 = vsel %vm1242, %v1221, %v1229
    %v1249 = vsel %vm1242, %v1223, %v1231
    %v1250 = vsel %vm1242, %v1225, %v1233
    %v1251 = vsel %vm1242, %v1211, %v1219
    %v1252 = vsel %vm1242, %v1213, %v1221
    %v1253 = vsel %vm1242, %v1215, %v1223
    %v1254 = vsel %vm1242, %v1217, %v1225
    %v1255 = vsel %vm1242, %v1235, %v1211
    %v1256 = vsel %vm1242, %v1237, %v1213
    %v1257 = vsel %vm1242, %v1239, %v1215
    %v1258 = vsel %vm1242, %v1241, %v1217
    %s1259 = scalar_lea.vmem %s2, 224
    %v1260 = vld [vmem:[%s1259] sm:$0xff]
    %v1261 = vld [vmem:[%s1259 + $0x8] sm:$0xff]
    %v1262 = vld [vmem:[%s1259 + $0x10] sm:$0xff]
    %v1263 = vld [vmem:[%s1259 + $0x18] sm:$0xff]
    %1265 = vset.pattern.permute.xlu0 0
    %1266 = vperm.xlu0 %1265, %v1260
    %v1267 = vpop.permute.xlu0 %1266
    %1270 = vset.pattern.permute.xlu0 0
    %1271 = vperm.xlu0 %1270, %v1261
    %v1272 = vpop.permute.xlu0 %1271
    %1275 = vset.pattern.permute.xlu0 0
    %1276 = vperm.xlu0 %1275, %v1262
    %v1277 = vpop.permute.xlu0 %1276
    %1280 = vset.pattern.permute.xlu0 0
    %1281 = vperm.xlu0 %1280, %v1263
    %v1282 = vpop.permute.xlu0 %1281
    %v1284 = vmul.f32 %v1251, %v1267
    %v1285 = vmul.f32 %v1247, %v1267
    %v1286 = vmul.f32 %v1243, %v1267
    %v1287 = vmul.f32 %v1255, %v1267
    %v1288 = vmul.f32 %v1252, %v1272
    %v1289 = vmul.f32 %v1248, %v1272
    %v1290 = vmul.f32 %v1244, %v1272
    %v1291 = vmul.f32 %v1256, %v1272
    %v1292 = vmul.f32 %v1253, %v1277
    %v1293 = vmul.f32 %v1249, %v1277
    %v1294 = vmul.f32 %v1245, %v1277
    %v1295 = vmul.f32 %v1257, %v1277
    %v1296 = vmul.f32 %v1254, %v1282
    %v1297 = vmul.f32 %v1250, %v1282
    %v1298 = vmul.f32 %v1246, %v1282
    %v1299 = vmul.f32 %v1258, %v1282
    %s1300 = scalar_lea.vmem %s3, 28
    %v1301 = vld [vmem:[%s1300] sm:$0xf]
    %v1303 = vlaneseq
    %v1304 = vshrl.u32 %v1303, 7
    %v1305 = vsub.s32 0, %v1304
    %v1306 = vrot.slane %v1301, %v1305
    %v1307 = vlaneseq
    %v1308 = vshrl.u32 %v1307, 7
    %v1309 = vsub.s32 1, %v1308
    %v1310 = vrot.slane %v1301, %v1309
    %v1311 = vlaneseq
    %v1312 = vshrl.u32 %v1311, 7
    %v1313 = vsub.s32 2, %v1312
    %v1314 = vrot.slane %v1301, %v1313
    %v1315 = vlaneseq
    %v1316 = vshrl.u32 %v1315, 7
    %v1317 = vsub.s32 3, %v1316
    %v1318 = vrot.slane %v1301, %v1317
    %v1323 = vmul.f32 %v1284, %v1306
    %v1324 = vmul.f32 %v1285, %v1310
    %v1325 = vmul.f32 %v1286, %v1314
    %v1326 = vmul.f32 %v1287, %v1318
    %v1327 = vmul.f32 %v1288, %v1306
    %v1328 = vmul.f32 %v1289, %v1310
    %v1329 = vmul.f32 %v1290, %v1314
    %v1330 = vmul.f32 %v1291, %v1318
    %v1331 = vmul.f32 %v1292, %v1306
    %v1332 = vmul.f32 %v1293, %v1310
    %v1333 = vmul.f32 %v1294, %v1314
    %v1334 = vmul.f32 %v1295, %v1318
    %v1335 = vmul.f32 %v1296, %v1306
    %v1336 = vmul.f32 %v1297, %v1310
    %v1337 = vmul.f32 %v1298, %v1314
    %v1338 = vmul.f32 %v1299, %v1318
    %v1339 = vadd.f32 %v1194, %v1323
    %v1340 = vadd.f32 %v1195, %v1324
    %v1341 = vadd.f32 %v1196, %v1325
    %v1342 = vadd.f32 %v1197, %v1326
    %v1343 = vadd.f32 %v1198, %v1327
    %v1344 = vadd.f32 %v1199, %v1328
    %v1345 = vadd.f32 %v1200, %v1329
    %v1346 = vadd.f32 %v1201, %v1330
    %v1347 = vadd.f32 %v1202, %v1331
    %v1348 = vadd.f32 %v1203, %v1332
    %v1349 = vadd.f32 %v1204, %v1333
    %v1350 = vadd.f32 %v1205, %v1334
    %v1351 = vadd.f32 %v1206, %v1335
    %v1352 = vadd.f32 %v1207, %v1336
    %v1353 = vadd.f32 %v1208, %v1337
    %v1354 = vadd.f32 %v1209, %v1338
    %1355 = vrot.lane.b32.xlu0 %v243, 111
    %v1356 = vpop.permute.xlu0 %1355
    %1357 = vrot.lane.b32.xlu0 %v247, 111
    %v1358 = vpop.permute.xlu0 %1357
    %1359 = vrot.lane.b32.xlu0 %v251, 111
    %v1360 = vpop.permute.xlu0 %1359
    %1361 = vrot.lane.b32.xlu0 %v255, 111
    %v1362 = vpop.permute.xlu0 %1361
    %1363 = vrot.lane.b32.xlu0 %v244, 111
    %v1364 = vpop.permute.xlu0 %1363
    %1365 = vrot.lane.b32.xlu0 %v248, 111
    %v1366 = vpop.permute.xlu0 %1365
    %1367 = vrot.lane.b32.xlu0 %v252, 111
    %v1368 = vpop.permute.xlu0 %1367
    %1369 = vrot.lane.b32.xlu0 %v256, 111
    %v1370 = vpop.permute.xlu0 %1369
    %1371 = vrot.lane.b32.xlu0 %v245, 111
    %v1372 = vpop.permute.xlu0 %1371
    %1373 = vrot.lane.b32.xlu0 %v249, 111
    %v1374 = vpop.permute.xlu0 %1373
    %1375 = vrot.lane.b32.xlu0 %v253, 111
    %v1376 = vpop.permute.xlu0 %1375
    %1377 = vrot.lane.b32.xlu0 %v257, 111
    %v1378 = vpop.permute.xlu0 %1377
    %1379 = vrot.lane.b32.xlu0 %v246, 111
    %v1380 = vpop.permute.xlu0 %1379
    %1381 = vrot.lane.b32.xlu0 %v250, 111
    %v1382 = vpop.permute.xlu0 %1381
    %1383 = vrot.lane.b32.xlu0 %v254, 111
    %v1384 = vpop.permute.xlu0 %1383
    %1385 = vrot.lane.b32.xlu0 %v258, 111
    %v1386 = vpop.permute.xlu0 %1385
    %vm1387 = vcmp.lt.s32.totalorder %v373, 111
    %v1388 = vsel %vm1387, %v1372, %v1380
    %v1389 = vsel %vm1387, %v1374, %v1382
    %v1390 = vsel %vm1387, %v1376, %v1384
    %v1391 = vsel %vm1387, %v1378, %v1386
    %v1392 = vsel %vm1387, %v1364, %v1372
    %v1393 = vsel %vm1387, %v1366, %v1374
    %v1394 = vsel %vm1387, %v1368, %v1376
    %v1395 = vsel %vm1387, %v1370, %v1378
    %v1396 = vsel %vm1387, %v1356, %v1364
    %v1397 = vsel %vm1387, %v1358, %v1366
    %v1398 = vsel %vm1387, %v1360, %v1368
    %v1399 = vsel %vm1387, %v1362, %v1370
    %v1400 = vsel %vm1387, %v1380, %v1356
    %v1401 = vsel %vm1387, %v1382, %v1358
    %v1402 = vsel %vm1387, %v1384, %v1360
    %v1403 = vsel %vm1387, %v1386, %v1362
    %s1404 = scalar_lea.vmem %s2, 256
    %v1405 = vld [vmem:[%s1404] sm:$0xff]
    %v1406 = vld [vmem:[%s1404 + $0x8] sm:$0xff]
    %v1407 = vld [vmem:[%s1404 + $0x10] sm:$0xff]
    %v1408 = vld [vmem:[%s1404 + $0x18] sm:$0xff]
    %1410 = vset.pattern.permute.xlu0 0
    %1411 = vperm.xlu0 %1410, %v1405
    %v1412 = vpop.permute.xlu0 %1411
    %1415 = vset.pattern.permute.xlu0 0
    %1416 = vperm.xlu0 %1415, %v1406
    %v1417 = vpop.permute.xlu0 %1416
    %1420 = vset.pattern.permute.xlu0 0
    %1421 = vperm.xlu0 %1420, %v1407
    %v1422 = vpop.permute.xlu0 %1421
    %1425 = vset.pattern.permute.xlu0 0
    %1426 = vperm.xlu0 %1425, %v1408
    %v1427 = vpop.permute.xlu0 %1426
    %v1429 = vmul.f32 %v1396, %v1412
    %v1430 = vmul.f32 %v1392, %v1412
    %v1431 = vmul.f32 %v1388, %v1412
    %v1432 = vmul.f32 %v1400, %v1412
    %v1433 = vmul.f32 %v1397, %v1417
    %v1434 = vmul.f32 %v1393, %v1417
    %v1435 = vmul.f32 %v1389, %v1417
    %v1436 = vmul.f32 %v1401, %v1417
    %v1437 = vmul.f32 %v1398, %v1422
    %v1438 = vmul.f32 %v1394, %v1422
    %v1439 = vmul.f32 %v1390, %v1422
    %v1440 = vmul.f32 %v1402, %v1422
    %v1441 = vmul.f32 %v1399, %v1427
    %v1442 = vmul.f32 %v1395, %v1427
    %v1443 = vmul.f32 %v1391, %v1427
    %v1444 = vmul.f32 %v1403, %v1427
    %s1445 = scalar_lea.vmem %s3, 32
    %v1446 = vld [vmem:[%s1445] sm:$0xf]
    %v1448 = vlaneseq
    %v1449 = vshrl.u32 %v1448, 7
    %v1450 = vsub.s32 0, %v1449
    %v1451 = vrot.slane %v1446, %v1450
    %v1452 = vlaneseq
    %v1453 = vshrl.u32 %v1452, 7
    %v1454 = vsub.s32 1, %v1453
    %v1455 = vrot.slane %v1446, %v1454
    %v1456 = vlaneseq
    %v1457 = vshrl.u32 %v1456, 7
    %v1458 = vsub.s32 2, %v1457
    %v1459 = vrot.slane %v1446, %v1458
    %v1460 = vlaneseq
    %v1461 = vshrl.u32 %v1460, 7
    %v1462 = vsub.s32 3, %v1461
    %v1463 = vrot.slane %v1446, %v1462
    %v1468 = vmul.f32 %v1429, %v1451
    %v1469 = vmul.f32 %v1430, %v1455
    %v1470 = vmul.f32 %v1431, %v1459
    %v1471 = vmul.f32 %v1432, %v1463
    %v1472 = vmul.f32 %v1433, %v1451
    %v1473 = vmul.f32 %v1434, %v1455
    %v1474 = vmul.f32 %v1435, %v1459
    %v1475 = vmul.f32 %v1436, %v1463
    %v1476 = vmul.f32 %v1437, %v1451
    %v1477 = vmul.f32 %v1438, %v1455
    %v1478 = vmul.f32 %v1439, %v1459
    %v1479 = vmul.f32 %v1440, %v1463
    %v1480 = vmul.f32 %v1441, %v1451
    %v1481 = vmul.f32 %v1442, %v1455
    %v1482 = vmul.f32 %v1443, %v1459
    %v1483 = vmul.f32 %v1444, %v1463
    %v1484 = vadd.f32 %v1339, %v1468
    %v1485 = vadd.f32 %v1340, %v1469
    %v1486 = vadd.f32 %v1341, %v1470
    %v1487 = vadd.f32 %v1342, %v1471
    %v1488 = vadd.f32 %v1343, %v1472
    %v1489 = vadd.f32 %v1344, %v1473
    %v1490 = vadd.f32 %v1345, %v1474
    %v1491 = vadd.f32 %v1346, %v1475
    %v1492 = vadd.f32 %v1347, %v1476
    %v1493 = vadd.f32 %v1348, %v1477
    %v1494 = vadd.f32 %v1349, %v1478
    %v1495 = vadd.f32 %v1350, %v1479
    %v1496 = vadd.f32 %v1351, %v1480
    %v1497 = vadd.f32 %v1352, %v1481
    %v1498 = vadd.f32 %v1353, %v1482
    %v1499 = vadd.f32 %v1354, %v1483
    %v1500 = vmax.f32 %v1484, 0.0
    %v1501 = vmax.f32 %v1485, 0.0
    %v1502 = vmax.f32 %v1486, 0.0
    %v1503 = vmax.f32 %v1487, 0.0
    %v1504 = vmax.f32 %v1488, 0.0
    %v1505 = vmax.f32 %v1489, 0.0
    %v1506 = vmax.f32 %v1490, 0.0
    %v1507 = vmax.f32 %v1491, 0.0
    %v1508 = vmax.f32 %v1492, 0.0
    %v1509 = vmax.f32 %v1493, 0.0
    %v1510 = vmax.f32 %v1494, 0.0
    %v1511 = vmax.f32 %v1495, 0.0
    %v1512 = vmax.f32 %v1496, 0.0
    %v1513 = vmax.f32 %v1497, 0.0
    %v1514 = vmax.f32 %v1498, 0.0
    %v1515 = vmax.f32 %v1499, 0.0
    %v1516 = vld [vmem:[%s5] sm:$0xff]
    %v1517 = vld [vmem:[%s6] sm:$0xff]
    %v1519 = vsel %vm39, %v1517, 0
    %1521 = vmatprep.subr.mxu0 0.0
    %1522 = vmatpush1.msra.mxu0 0.0
    %1523 = vmatprep.subr.mxu0 0.0
    %1524 = vmatpush1.msra.mxu0 0.0
    %1525 = vmatprep.subr.mxu0 0.0
    %1526 = vmatpush1.msra.mxu0 0.0
    %1527 = vmatprep.subr.mxu0 0.0
    %1528 = vmatpush1.msra.mxu0 0.0
    %1529 = vmatprep.subr.mxu0 0.0
    %1530 = vmatpush1.msra.mxu0 0.0
    %1531 = vmatprep.subr.mxu0 0.0
    %1532 = vmatpush1.msra.mxu0 0.0
    %1533 = vmatprep.subr.mxu0 0.0
    %1534 = vmatpush1.msra.mxu0 0.0
    %1535 = vmatprep.subr.mxu0 0.0
    %1536 = vmatpush1.msra.mxu0 0.0
    %1537 = vmatprep.subr.mxu0 0.0
    %1538 = vmatpush1.msra.mxu0 0.0
    %1539 = vmatprep.subr.mxu0 0.0
    %1540 = vmatpush1.msra.mxu0 0.0
    %1541 = vmatprep.subr.mxu0 0.0
    %1542 = vmatpush1.msra.mxu0 0.0
    %1543 = vmatprep.subr.mxu0 0.0
    %1544 = vmatpush1.msra.mxu0 0.0
    %1545 = vmatprep.subr.mxu0 0.0
    %1546 = vmatpush1.msra.mxu0 0.0
    %1547 = vmatprep.subr.mxu0 0.0
    %1548 = vmatpush1.msra.mxu0 0.0
    %1549 = vmatprep.subr.mxu0 %v57
    %1550 = vmatpush1.msra.mxu0 %v54
    %1551 = vmatprep.subr.mxu0 %v32
    %1552 = vmatpush1.msra.mxu0 %v31
    %1553 = vmatprep.subr.mxu0 0.0
    %1554 = vmatpush2.msra.mxu0 0.0
    %1555 = vmatprep.subr.mxu0 0.0
    %1556 = vmatpush2.msra.mxu0 0.0
    %1557 = vmatprep.subr.mxu0 0.0
    %1558 = vmatpush2.msra.mxu0 0.0
    %1559 = vmatprep.subr.mxu0 0.0
    %1560 = vmatpush2.msra.mxu0 0.0
    %1561 = vmatprep.subr.mxu0 0.0
    %1562 = vmatpush2.msra.mxu0 0.0
    %1563 = vmatprep.subr.mxu0 0.0
    %1564 = vmatpush2.msra.mxu0 0.0
    %1565 = vmatprep.subr.mxu0 0.0
    %1566 = vmatpush2.msra.mxu0 0.0
    %1567 = vmatprep.subr.mxu0 0.0
    %1568 = vmatpush2.msra.mxu0 0.0
    %1569 = vmatprep.subr.mxu0 0.0
    %1570 = vmatpush2.msra.mxu0 0.0
    %1571 = vmatprep.subr.mxu0 0.0
    %1572 = vmatpush2.msra.mxu0 0.0
    %1573 = vmatprep.subr.mxu0 0.0
    %1574 = vmatpush2.msra.mxu0 0.0
    %1575 = vmatprep.subr.mxu0 0.0
    %1576 = vmatpush2.msra.mxu0 0.0
    %1577 = vmatprep.subr.mxu0 0.0
    %1578 = vmatpush2.msra.mxu0 0.0
    %1579 = vmatprep.subr.mxu0 0.0
    %1580 = vmatpush2.msra.mxu0 0.0
    %1581 = vmatprep.subr.mxu0 0.0
    %1582 = vmatpush2.msra.mxu0 0.0
    %1583 = vmatprep.subr.mxu0 0.0
    %1584 = vmatpush2.msra.mxu0 0.0
    %1585 = vmatprep.mubr.f32.mxu0 0.0
    %1586 = vmatmul.mubr.f32.gmra.mxu0 %v1519
    %v1587 = vpop.f32.mrf.mxu0
    %v1588 = vadd.f32 0.0, %v1587
    %v1589 = vpop.f32.mrf.mxu0
    %v1590 = vadd.f32 0.0, %v1589
    %1591 = vdwg.mxu0
    %1592 = vmatprep.subr.mxu0 0.0
    %1593 = vmatpush1.msra.mxu0 0.0
    %1594 = vmatprep.subr.mxu0 0.0
    %1595 = vmatpush1.msra.mxu0 0.0
    %1596 = vmatprep.subr.mxu0 0.0
    %1597 = vmatpush1.msra.mxu0 0.0
    %1598 = vmatprep.subr.mxu0 0.0
    %1599 = vmatpush1.msra.mxu0 0.0
    %1600 = vmatprep.subr.mxu0 0.0
    %1601 = vmatpush1.msra.mxu0 0.0
    %1602 = vmatprep.subr.mxu0 0.0
    %1603 = vmatpush1.msra.mxu0 0.0
    %1604 = vmatprep.subr.mxu0 0.0
    %1605 = vmatpush1.msra.mxu0 0.0
    %1606 = vmatprep.subr.mxu0 0.0
    %1607 = vmatpush1.msra.mxu0 0.0
    %1608 = vmatprep.subr.mxu0 0.0
    %1609 = vmatpush1.msra.mxu0 0.0
    %1610 = vmatprep.subr.mxu0 0.0
    %1611 = vmatpush1.msra.mxu0 0.0
    %1612 = vmatprep.subr.mxu0 0.0
    %1613 = vmatpush1.msra.mxu0 0.0
    %1614 = vmatprep.subr.mxu0 0.0
    %1615 = vmatpush1.msra.mxu0 0.0
    %1616 = vmatprep.subr.mxu0 0.0
    %1617 = vmatpush1.msra.mxu0 0.0
    %1618 = vmatprep.subr.mxu0 0.0
    %1619 = vmatpush1.msra.mxu0 0.0
    %1620 = vmatprep.subr.mxu0 %v63
    %1621 = vmatpush1.msra.mxu0 %v60
    %1622 = vmatprep.subr.mxu0 %v34
    %1623 = vmatpush1.msra.mxu0 %v33
    %1624 = vmatprep.subr.mxu0 0.0
    %1625 = vmatpush2.msra.mxu0 0.0
    %1626 = vmatprep.subr.mxu0 0.0
    %1627 = vmatpush2.msra.mxu0 0.0
    %1628 = vmatprep.subr.mxu0 0.0
    %1629 = vmatpush2.msra.mxu0 0.0
    %1630 = vmatprep.subr.mxu0 0.0
    %1631 = vmatpush2.msra.mxu0 0.0
    %1632 = vmatprep.subr.mxu0 0.0
    %1633 = vmatpush2.msra.mxu0 0.0
    %1634 = vmatprep.subr.mxu0 0.0
    %1635 = vmatpush2.msra.mxu0 0.0
    %1636 = vmatprep.subr.mxu0 0.0
    %1637 = vmatpush2.msra.mxu0 0.0
    %1638 = vmatprep.subr.mxu0 0.0
    %1639 = vmatpush2.msra.mxu0 0.0
    %1640 = vmatprep.subr.mxu0 0.0
    %1641 = vmatpush2.msra.mxu0 0.0
    %1642 = vmatprep.subr.mxu0 0.0
    %1643 = vmatpush2.msra.mxu0 0.0
    %1644 = vmatprep.subr.mxu0 0.0
    %1645 = vmatpush2.msra.mxu0 0.0
    %1646 = vmatprep.subr.mxu0 0.0
    %1647 = vmatpush2.msra.mxu0 0.0
    %1648 = vmatprep.subr.mxu0 0.0
    %1649 = vmatpush2.msra.mxu0 0.0
    %1650 = vmatprep.subr.mxu0 0.0
    %1651 = vmatpush2.msra.mxu0 0.0
    %1652 = vmatprep.subr.mxu0 0.0
    %1653 = vmatpush2.msra.mxu0 0.0
    %1654 = vmatprep.subr.mxu0 0.0
    %1655 = vmatpush2.msra.mxu0 0.0
    %1656 = vmatprep.mubr.f32.mxu0 0.0
    %1657 = vmatmul.mubr.f32.gmra.mxu0 %v1519
    %v1658 = vpop.f32.mrf.mxu0
    %v1659 = vadd.f32 0.0, %v1658
    %v1660 = vpop.f32.mrf.mxu0
    %v1661 = vadd.f32 0.0, %v1660
    %1662 = vdwg.mxu0
    %vm1663 = vcmask 261120
    %v1665 = vsel %vm1663, %v1516, 0
    %1667 = vmatprep.subr.mxu0 0.0
    %1668 = vmatpush1.msra.mxu0 0.0
    %1669 = vmatprep.subr.mxu0 0.0
    %1670 = vmatpush1.msra.mxu0 0.0
    %1671 = vmatprep.subr.mxu0 0.0
    %1672 = vmatpush1.msra.mxu0 0.0
    %1673 = vmatprep.subr.mxu0 0.0
    %1674 = vmatpush1.msra.mxu0 0.0
    %1675 = vmatprep.subr.mxu0 0.0
    %1676 = vmatpush1.msra.mxu0 0.0
    %1677 = vmatprep.subr.mxu0 0.0
    %1678 = vmatpush1.msra.mxu0 0.0
    %1679 = vmatprep.subr.mxu0 0.0
    %1680 = vmatpush1.msra.mxu0 0.0
    %1681 = vmatprep.subr.mxu0 0.0
    %1682 = vmatpush1.msra.mxu0 0.0
    %1683 = vmatprep.subr.mxu0 0.0
    %1684 = vmatpush1.msra.mxu0 0.0
    %1685 = vmatprep.subr.mxu0 0.0
    %1686 = vmatpush1.msra.mxu0 0.0
    %1687 = vmatprep.subr.mxu0 0.0
    %1688 = vmatpush1.msra.mxu0 0.0
    %1689 = vmatprep.subr.mxu0 0.0
    %1690 = vmatpush1.msra.mxu0 0.0
    %1691 = vmatprep.subr.mxu0 %v1513
    %1692 = vmatpush1.msra.mxu0 %v1512
    %1693 = vmatprep.subr.mxu0 %v1509
    %1694 = vmatpush1.msra.mxu0 %v1508
    %1695 = vmatprep.subr.mxu0 %v1505
    %1696 = vmatpush1.msra.mxu0 %v1504
    %1697 = vmatprep.subr.mxu0 %v1501
    %1698 = vmatpush1.msra.mxu0 %v1500
    %1699 = vmatprep.subr.mxu0 0.0
    %1700 = vmatpush2.msra.mxu0 0.0
    %1701 = vmatprep.subr.mxu0 0.0
    %1702 = vmatpush2.msra.mxu0 0.0
    %1703 = vmatprep.subr.mxu0 0.0
    %1704 = vmatpush2.msra.mxu0 0.0
    %1705 = vmatprep.subr.mxu0 0.0
    %1706 = vmatpush2.msra.mxu0 0.0
    %1707 = vmatprep.subr.mxu0 0.0
    %1708 = vmatpush2.msra.mxu0 0.0
    %1709 = vmatprep.subr.mxu0 0.0
    %1710 = vmatpush2.msra.mxu0 0.0
    %1711 = vmatprep.subr.mxu0 0.0
    %1712 = vmatpush2.msra.mxu0 0.0
    %1713 = vmatprep.subr.mxu0 0.0
    %1714 = vmatpush2.msra.mxu0 0.0
    %1715 = vmatprep.subr.mxu0 0.0
    %1716 = vmatpush2.msra.mxu0 0.0
    %1717 = vmatprep.subr.mxu0 0.0
    %1718 = vmatpush2.msra.mxu0 0.0
    %1719 = vmatprep.subr.mxu0 0.0
    %1720 = vmatpush2.msra.mxu0 0.0
    %1721 = vmatprep.subr.mxu0 0.0
    %1722 = vmatpush2.msra.mxu0 0.0
    %1723 = vmatprep.subr.mxu0 0.0
    %1724 = vmatpush2.msra.mxu0 0.0
    %1725 = vmatprep.subr.mxu0 0.0
    %1726 = vmatpush2.msra.mxu0 0.0
    %1727 = vmatprep.subr.mxu0 0.0
    %1728 = vmatpush2.msra.mxu0 0.0
    %1729 = vmatprep.subr.mxu0 0.0
    %1730 = vmatpush2.msra.mxu0 0.0
    %1731 = vmatprep.mubr.f32.mxu0 0.0
    %1732 = vmatmul.mubr.f32.gmra.mxu0 %v1665
    %v1733 = vpop.f32.mrf.mxu0
    %v1734 = vadd.f32 %v1588, %v1733
    %v1735 = vpop.f32.mrf.mxu0
    %v1736 = vadd.f32 %v1590, %v1735
    %1737 = vdwg.mxu0
    %1738 = vmatprep.subr.mxu0 0.0
    %1739 = vmatpush1.msra.mxu0 0.0
    %1740 = vmatprep.subr.mxu0 0.0
    %1741 = vmatpush1.msra.mxu0 0.0
    %1742 = vmatprep.subr.mxu0 0.0
    %1743 = vmatpush1.msra.mxu0 0.0
    %1744 = vmatprep.subr.mxu0 0.0
    %1745 = vmatpush1.msra.mxu0 0.0
    %1746 = vmatprep.subr.mxu0 0.0
    %1747 = vmatpush1.msra.mxu0 0.0
    %1748 = vmatprep.subr.mxu0 0.0
    %1749 = vmatpush1.msra.mxu0 0.0
    %1750 = vmatprep.subr.mxu0 0.0
    %1751 = vmatpush1.msra.mxu0 0.0
    %1752 = vmatprep.subr.mxu0 0.0
    %1753 = vmatpush1.msra.mxu0 0.0
    %1754 = vmatprep.subr.mxu0 0.0
    %1755 = vmatpush1.msra.mxu0 0.0
    %1756 = vmatprep.subr.mxu0 0.0
    %1757 = vmatpush1.msra.mxu0 0.0
    %1758 = vmatprep.subr.mxu0 0.0
    %1759 = vmatpush1.msra.mxu0 0.0
    %1760 = vmatprep.subr.mxu0 0.0
    %1761 = vmatpush1.msra.mxu0 0.0
    %1762 = vmatprep.subr.mxu0 %v1515
    %1763 = vmatpush1.msra.mxu0 %v1514
    %1764 = vmatprep.subr.mxu0 %v1511
    %1765 = vmatpush1.msra.mxu0 %v1510
    %1766 = vmatprep.subr.mxu0 %v1507
    %1767 = vmatpush1.msra.mxu0 %v1506
    %1768 = vmatprep.subr.mxu0 %v1503
    %1769 = vmatpush1.msra.mxu0 %v1502
    %1770 = vmatprep.subr.mxu0 0.0
    %1771 = vmatpush2.msra.mxu0 0.0
    %1772 = vmatprep.subr.mxu0 0.0
    %1773 = vmatpush2.msra.mxu0 0.0
    %1774 = vmatprep.subr.mxu0 0.0
    %1775 = vmatpush2.msra.mxu0 0.0
    %1776 = vmatprep.subr.mxu0 0.0
    %1777 = vmatpush2.msra.mxu0 0.0
    %1778 = vmatprep.subr.mxu0 0.0
    %1779 = vmatpush2.msra.mxu0 0.0
    %1780 = vmatprep.subr.mxu0 0.0
    %1781 = vmatpush2.msra.mxu0 0.0
    %1782 = vmatprep.subr.mxu0 0.0
    %1783 = vmatpush2.msra.mxu0 0.0
    %1784 = vmatprep.subr.mxu0 0.0
    %1785 = vmatpush2.msra.mxu0 0.0
    %1786 = vmatprep.subr.mxu0 0.0
    %1787 = vmatpush2.msra.mxu0 0.0
    %1788 = vmatprep.subr.mxu0 0.0
    %1789 = vmatpush2.msra.mxu0 0.0
    %1790 = vmatprep.subr.mxu0 0.0
    %1791 = vmatpush2.msra.mxu0 0.0
    %1792 = vmatprep.subr.mxu0 0.0
    %1793 = vmatpush2.msra.mxu0 0.0
    %1794 = vmatprep.subr.mxu0 0.0
    %1795 = vmatpush2.msra.mxu0 0.0
    %1796 = vmatprep.subr.mxu0 0.0
    %1797 = vmatpush2.msra.mxu0 0.0
    %1798 = vmatprep.subr.mxu0 0.0
    %1799 = vmatpush2.msra.mxu0 0.0
    %1800 = vmatprep.subr.mxu0 0.0
    %1801 = vmatpush2.msra.mxu0 0.0
    %1802 = vmatprep.mubr.f32.mxu0 0.0
    %1803 = vmatmul.mubr.f32.gmra.mxu0 %v1665
    %v1804 = vpop.f32.mrf.mxu0
    %v1805 = vadd.f32 %v1659, %v1804
    %v1806 = vpop.f32.mrf.mxu0
    %v1807 = vadd.f32 %v1661, %v1806
    %1808 = vdwg.mxu0
    %1809 = vst [vmem:[#allocation2] sm:$0xff] %v1734
    %1810 = vst [vmem:[#allocation2 + $0x8] sm:$0xff] %v1736
    %1811 = vst [vmem:[#allocation2 + $0x10] sm:$0xff] %v1805
    %1812 = vst [vmem:[#allocation2 + $0x18] sm:$0xff] %v1807
    // Predicated region
    $region30: #{tpu_custom_call.1} parent=1 // pred_check
      _
    $region31: #{tpu_custom_call.1} parent=1 // pred_check_branch
      %1814 = sbr.rel (0) target = $region33
    $region32: #{tpu_custom_call.1} parent=1 // pred_region
      %s1816 = ssub.s32 512, 512
      %1817 = vsyncadd [#allocation3], %s1816
      %s1819 = sshll.u32 [#allocation2], 4
      %s1820 = int_to_ptr.vmem [resolvable:$true] %s1819
      %1822 = dma.vmem_to_hbm [thread:$0]  %s1820, 512, %s7, [#allocation3]
    $region33: #{tpu_custom_call.1} parent=1 // pred_fallthru
      _
    // Predicated region
    $region34: #{tpu_custom_call.1} parent=1 // pred_check
      _
    $region35: #{tpu_custom_call.1} parent=1 // pred_check_branch
      %1824 = sbr.rel (0) target = $region37
    $region36: #{tpu_custom_call.1} parent=1 // pred_region
      %1825 = dma.done [#allocation3], 512
    $region37: #{tpu_custom_call.1} parent=1 // pred_fallthru
      _
    %1826 = vsyncpa [#allocation3], 1

</llo_original>
